<compile_context>
chip_gen: v6e
topology: v6e:2x2x1
jax: 0.10.0
libtpu: 0.0.40
codegen_flags: <defaults>
</compile_context>

<pallas_src>
import functools

import jax
import jax.numpy as jnp
from jax.experimental import pallas as pl
from jax.experimental.pallas import tpu as pltpu

EPS = 1e-5


def _stage_kernel(*refs, H, W, C, TH, relu, add_residual):
    """One conv + instance-norm stage for one batch element, H-tiled.

    refs (in order):
      x_main: (1, TH, W+2, C)  padded rows [t*TH, (t+1)*TH)
      x_halo: (1, 2,  W+2, C)  padded rows [(t+1)*TH, (t+1)*TH + 2)
      w:      (9*C, C)         conv weight, row index = (ky*3+kx)*C + cin
      res:    (1, H, W, C)     residual (only when add_residual)
      out:    (1, H, W, C)     output block, resident across the row-tile axis
      sum/ssq:(1, C)           VMEM scratch, per-channel running stats
    """
    if add_residual:
        x_main, x_halo, w_ref, res_ref, out_ref, sum_ref, ssq_ref = refs
    else:
        x_main, x_halo, w_ref, out_ref, sum_ref, ssq_ref = refs
        res_ref = None

    t = pl.program_id(1)
    n_tiles = pl.num_programs(1)

    # Assemble the (TH + 2, W + 2, C) padded row band for this tile.
    band = jnp.concatenate([x_main[0], x_halo[0]], axis=0)

    # im2col: single K = 9*C matmul on the MXU.
    # TODO(synk): fold the kx taps via pltpu.roll on a lane-flattened view to
    # avoid the 9 shifted-slice copies (they are correct but cost VMEM/XLU).
    patches = []
    for ky in range(3):
        for kx in range(3):
            patches.append(band[ky:ky + TH, kx:kx + W, :].reshape(TH * W, C))
    p = jnp.concatenate(patches, axis=-1)                          # (TH*W, 9C)
    conv = jnp.dot(p, w_ref[...],
                   preferred_element_type=jnp.float32)             # (TH*W, C)

    # Stash the pre-norm conv tile into the resident output block.
    row0 = pl.multiple_of(t * TH, TH)
    out_ref[0, pl.ds(row0, TH), :, :] = conv.reshape(TH, W, C).astype(out_ref.dtype)

    # Single-pass per-channel stats accumulated across the row tiles.
    @pl.when(t == 0)
    def _init():
        sum_ref[...] = jnp.zeros_like(sum_ref)
        ssq_ref[...] = jnp.zeros_like(ssq_ref)

    sum_ref[...] += jnp.sum(conv, axis=0, keepdims=True)
    ssq_ref[...] += jnp.sum(conv * conv, axis=0, keepdims=True)

    # Finalize on the last row tile: normalize the whole image in place,
    # then ReLU (stage 1) or fused residual add (stage 2).
    @pl.when(t == n_tiles - 1)
    def _finalize():
        inv_hw = 1.0 / float(H * W)
        mean = sum_ref[...] * inv_hw                               # (1, C)
        var = ssq_ref[...] * inv_hw - mean * mean
        inv_std = jax.lax.rsqrt(var + EPS)
        z = out_ref[0].astype(jnp.float32).reshape(H * W, C)
        y = (z - mean) * inv_std
        if relu:
            y = jnp.maximum(y, 0.0)
        y = y.reshape(H, W, C)
        if add_residual:
            y = y + res_ref[0].astype(jnp.float32)
        out_ref[0] = y.astype(out_ref.dtype)


def _run_stage(xpad, w_flat, res, *, relu, row_tile):
    """One conv stage over the reflection-padded NHWC input `xpad`."""
    N, Hp, Wp, C = xpad.shape
    H, W = Hp - 2, Wp - 2
    add_residual = res is not None
    n_tiles = H // row_tile
    half = row_tile // 2   # halo block (size 2) index stride, needs row_tile even

    kernel = functools.partial(_stage_kernel, H=H, W=W, C=C, TH=row_tile,
                               relu=relu, add_residual=add_residual)

    in_specs = [
        # Main TH-row band of the padded input.
        pl.BlockSpec((1, row_tile, Wp, C), lambda n, t: (n, t, 0, 0)),
        # 2-row halo directly below the main band (block-aligned since
        # (t+1)*row_tile is a multiple of 2).
        pl.BlockSpec((1, 2, Wp, C), lambda n, t: (n, (t + 1) * half, 0, 0)),
        # Flattened conv weight, constant block index -> resident.
        pl.BlockSpec((9 * C, C), lambda n, t: (0, 0)),
    ]
    args = [xpad, xpad, w_flat]
    if add_residual:
        # Residual is only DMA'd for stage 2 (read once per batch element).
        in_specs.append(pl.BlockSpec((1, H, W, C), lambda n, t: (n, 0, 0, 0)))
        args.append(res)

    return pl.pallas_call(
        kernel,
        out_shape=jax.ShapeDtypeStruct((N, H, W, C), xpad.dtype),
        grid_spec=pltpu.PrefetchScalarGridSpec(
            num_scalar_prefetch=0,
            grid=(N, n_tiles),
            in_specs=in_specs,
            # Output block is resident across the row-tile axis; written back
            # to HBM once per batch element after the finalize step.
            out_specs=pl.BlockSpec((1, H, W, C), lambda n, t: (n, 0, 0, 0)),
            scratch_shapes=[pltpu.VMEM((1, C), jnp.float32),   # per-channel sum
                            pltpu.VMEM((1, C), jnp.float32)],  # per-channel sumsq
        ),
        compiler_params=pltpu.CompilerParams(
            dimension_semantics=("parallel", "arbitrary"),
            vmem_limit_bytes=64 * 1024 * 1024),
    )(*args)


def _pick_row_tile(H, W, C, itemsize=4, target_bytes=2 << 20):
    """Largest even divisor of H whose (TH+2, W+2, C) halo band fits the budget."""
    even_divs = [d for d in range(2, H + 1, 2) if H % d == 0]
    if not even_divs:
        # TODO(synk): odd H needs an element-granular halo BlockSpec.
        raise NotImplementedError("H must be even for the halo row tiling.")
    band_bytes = lambda th: (th + 2) * (W + 2) * C * itemsize
    fitting = [d for d in even_divs if band_bytes(d) <= target_bytes]
    return max(fitting) if fitting else min(even_divs)


def _reflect_pad(x_nhwc):
    # TODO(synk): fuse the reflection padding into the stage kernel (halo reads
    # with reflected boundary rows/cols) to avoid this extra HBM pass per stage.
    return jnp.pad(x_nhwc, ((0, 0), (1, 1), (1, 1), (0, 0)), mode="reflect")


def resnet_block_forward_nhwc(x, w1, w2, *, row_tile=None):
    """x + conv_block(x) in NHWC. w1/w2 are PyTorch-layout (Cout, Cin, 3, 3).

    Conv biases are omitted: InstanceNorm2d(affine=False) cancels them exactly.
    """
    N, H, W, C = x.shape
    if row_tile is None:
        row_tile = _pick_row_tile(H, W, C, jnp.dtype(x.dtype).itemsize)
    assert H % row_tile == 0 and row_tile % 2 == 0, (H, row_tile)

    def flat(w):  # (Cout, Cin, 3, 3) -> (9*C, C), row = (ky*3+kx)*C + cin
        return jnp.transpose(w, (2, 3, 1, 0)).reshape(9 * C, C)

    # Stage 1: pad -> conv -> instance-norm -> relu  (no residual input DMA'd).
    h = _run_stage(_reflect_pad(x), flat(w1), None, relu=True, row_tile=row_tile)
    # Stage 2: pad -> conv -> instance-norm, residual add fused into finalize.
    # TODO(synk): fuse the two stages per image so `h` never round-trips HBM.
    y = _run_stage(_reflect_pad(h), flat(w2), x, relu=False, row_tile=row_tile)
    return y


def resnet_block_forward(x_nchw, w1, w2, *, row_tile=None):
    """NCHW adapter (PyTorch convention) around the NHWC kernels.

    TODO(synk): keep activations NHWC across the whole network and drop these
    boundary transposes.
    """
    x = jnp.transpose(x_nchw, (0, 2, 3, 1))
    y = resnet_block_forward_nhwc(x, w1, w2, row_tile=row_tile)
    return jnp.transpose(y, (0, 3, 1, 2))


# ----------------------------- pure-JAX reference -----------------------------
def _ref_forward(x_nchw, w1, b1, w2, b2):
    """Faithful reference (including the conv biases the kernel drops)."""
    x = jnp.transpose(x_nchw, (0, 2, 3, 1))

    def conv(h, w, b):
        hp = jnp.pad(h, ((0, 0), (1, 1), (1, 1), (0, 0)), mode="reflect")
        out = jax.lax.conv_general_dilated(
            hp, jnp.transpose(w, (2, 3, 1, 0)), (1, 1), "VALID",
            dimension_numbers=("NHWC", "HWIO", "NHWC"))
        return out + b.reshape(1, 1, 1, -1)

    def inorm(h):
        mean = jnp.mean(h, axis=(1, 2), keepdims=True)
        var = jnp.mean((h - mean) ** 2, axis=(1, 2), keepdims=True)
        return (h - mean) * jax.lax.rsqrt(var + EPS)

    h = jnp.maximum(inorm(conv(x, w1, b1)), 0.0)
    y = inorm(conv(h, w2, b2)) + x
    return jnp.transpose(y, (0, 3, 1, 2))


if __name__ == "__main__":
    N, C, H, W = 2, 4, 16, 16
    key = jax.random.PRNGKey(0)
    kx, kw1, kb1, kw2, kb2 = jax.random.split(key, 5)

    x = jax.random.normal(kx, (N, C, H, W), dtype=jnp.float32)
    # PyTorch-layout conv params (Cout, Cin, 3, 3) and biases (C,).
    w1 = 0.1 * jax.random.normal(kw1, (C, C, 3, 3), dtype=jnp.float32)
    b1 = 0.1 * jax.random.normal(kb1, (C,), dtype=jnp.float32)
    w2 = 0.1 * jax.random.normal(kw2, (C, C, 3, 3), dtype=jnp.float32)
    b2 = 0.1 * jax.random.normal(kb2, (C,), dtype=jnp.float32)

    ref = jax.block_until_ready(_ref_forward(x, w1, b1, w2, b2))

    # Exercise both the multi-tile path (grid=(N,2)) and the auto-picked
    # single-tile path (grid=(N,1)).
    for rt in (8, None):
        out = jax.block_until_ready(resnet_block_forward(x, w1, w2, row_tile=rt))
        assert out.shape == (N, C, H, W)
        err = jnp.max(jnp.abs(out - ref))
        assert jnp.allclose(out, ref, atol=2e-4, rtol=2e-4), (
            f"row_tile={rt}: max abs err {err}")
    print("KERNEL_OK")
</pallas_src>

<mosaic_0001>
module attributes {stable_mosaic.version = 11 : i64} {
  func.func @_stage_kernel(%arg0: i32, %arg1: i32, %arg2: memref<1x8x18x4xf32, #tpu.memory_space<vmem>>, %arg3: memref<1x2x18x4xf32, #tpu.memory_space<vmem>>, %arg4: memref<36x4xf32, #tpu.memory_space<vmem>>, %arg5: memref<1x16x16x4xf32, #tpu.memory_space<vmem>>, %arg6: memref<1x4xf32, #tpu.memory_space<vmem>>, %arg7: memref<1x4xf32, #tpu.memory_space<vmem>>) attributes {dimension_semantics = [#tpu.dimension_semantics<parallel>, #tpu.dimension_semantics<arbitrary>], iteration_bounds = array<i64: 2, 2>, scalar_prefetch = 0 : i64, scratch_operands = 2 : i64, tpu.core_type = #tpu.core_type<tc>, window_params = [{transform_indices = @transform_0, window_bounds = array<i64: 1, 8, 18, 4>}, {transform_indices = @transform_1, window_bounds = array<i64: 1, 2, 18, 4>}, {pipeline_mode = #tpu.pipeline_mode<synchronous>, transform_indices = @transform_2, window_bounds = array<i64: 36, 4>}, {transform_indices = @transform_3, window_bounds = array<i64: 1, 16, 16, 4>}]} {
    %c0 = arith.constant 0 : index
    %c0_0 = arith.constant 0 : index
    %c0_1 = arith.constant 0 : index
    %c0_2 = arith.constant 0 : index
    %0 = vector.load %arg2[%c0, %c0_0, %c0_1, %c0_2] : memref<1x8x18x4xf32, #tpu.memory_space<vmem>>, vector<1x8x18x4xf32>
    %1 = vector.shape_cast %0 : vector<1x8x18x4xf32> to vector<8x18x4xf32>
    %c0_3 = arith.constant 0 : index
    %c0_4 = arith.constant 0 : index
    %c0_5 = arith.constant 0 : index
    %c0_6 = arith.constant 0 : index
    %2 = vector.load %arg3[%c0_3, %c0_4, %c0_5, %c0_6] : memref<1x2x18x4xf32, #tpu.memory_space<vmem>>, vector<1x2x18x4xf32>
    %3 = vector.shape_cast %2 : vector<1x2x18x4xf32> to vector<2x18x4xf32>
    %4 = tpu.concatenate %1, %3 in 0 : vector<8x18x4xf32>, vector<2x18x4xf32> -> vector<10x18x4xf32>
    %5 = vector.extract_strided_slice %4 {offsets = [0, 0, 0], sizes = [8, 16, 4], strides = [1, 1, 1]} : vector<10x18x4xf32> to vector<8x16x4xf32>
    %6 = vector.shape_cast %5 : vector<8x16x4xf32> to vector<128x4xf32>
    %7 = vector.extract_strided_slice %4 {offsets = [0, 1, 0], sizes = [8, 16, 4], strides = [1, 1, 1]} : vector<10x18x4xf32> to vector<8x16x4xf32>
    %8 = vector.shape_cast %7 : vector<8x16x4xf32> to vector<128x4xf32>
    %9 = vector.extract_strided_slice %4 {offsets = [0, 2, 0], sizes = [8, 16, 4], strides = [1, 1, 1]} : vector<10x18x4xf32> to vector<8x16x4xf32>
    %10 = vector.shape_cast %9 : vector<8x16x4xf32> to vector<128x4xf32>
    %11 = vector.extract_strided_slice %4 {offsets = [1, 0, 0], sizes = [8, 16, 4], strides = [1, 1, 1]} : vector<10x18x4xf32> to vector<8x16x4xf32>
    %12 = vector.shape_cast %11 : vector<8x16x4xf32> to vector<128x4xf32>
    %13 = vector.extract_strided_slice %4 {offsets = [1, 1, 0], sizes = [8, 16, 4], strides = [1, 1, 1]} : vector<10x18x4xf32> to vector<8x16x4xf32>
    %14 = vector.shape_cast %13 : vector<8x16x4xf32> to vector<128x4xf32>
    %15 = vector.extract_strided_slice %4 {offsets = [1, 2, 0], sizes = [8, 16, 4], strides = [1, 1, 1]} : vector<10x18x4xf32> to vector<8x16x4xf32>
    %16 = vector.shape_cast %15 : vector<8x16x4xf32> to vector<128x4xf32>
    %17 = vector.extract_strided_slice %4 {offsets = [2, 0, 0], sizes = [8, 16, 4], strides = [1, 1, 1]} : vector<10x18x4xf32> to vector<8x16x4xf32>
    %18 = vector.shape_cast %17 : vector<8x16x4xf32> to vector<128x4xf32>
    %19 = vector.extract_strided_slice %4 {offsets = [2, 1, 0], sizes = [8, 16, 4], strides = [1, 1, 1]} : vector<10x18x4xf32> to vector<8x16x4xf32>
    %20 = vector.shape_cast %19 : vector<8x16x4xf32> to vector<128x4xf32>
    %21 = vector.extract_strided_slice %4 {offsets = [2, 2, 0], sizes = [8, 16, 4], strides = [1, 1, 1]} : vector<10x18x4xf32> to vector<8x16x4xf32>
    %22 = vector.shape_cast %21 : vector<8x16x4xf32> to vector<128x4xf32>
    %23 = tpu.concatenate %6, %8, %10, %12, %14, %16, %18, %20, %22 in 1 : vector<128x4xf32>, vector<128x4xf32>, vector<128x4xf32>, vector<128x4xf32>, vector<128x4xf32>, vector<128x4xf32>, vector<128x4xf32>, vector<128x4xf32>, vector<128x4xf32> -> vector<128x36xf32>
    %c0_7 = arith.constant 0 : index
    %c0_8 = arith.constant 0 : index
    %24 = vector.load %arg4[%c0_7, %c0_8] : memref<36x4xf32, #tpu.memory_space<vmem>>, vector<36x4xf32>
    %cst = arith.constant dense<0.000000e+00> : vector<128x4xf32>
    %25 = tpu.matmul %23, %24, %cst {dimension_numbers = #tpu.dot_dimension_numbers<[1], [0], [0], [1], [0, 0, 1, 1], [], []>} : vector<128x36xf32>, vector<36x4xf32>, vector<128x4xf32> -> vector<128x4xf32>
    %c8_i32 = arith.constant 8 : i32
    %26 = arith.muli %arg1, %c8_i32 : i32
    %27 = tpu.assume_multiple %26, 8 : i32
    %28 = vector.shape_cast %25 : vector<128x4xf32> to vector<8x16x4xf32>
    %c0_9 = arith.constant 0 : index
    %29 = arith.index_cast %27 : i32 to index
    %c0_10 = arith.constant 0 : index
    %c0_11 = arith.constant 0 : index
    %30 = vector.load %arg5[%c0_9, %29, %c0_10, %c0_11] : memref<1x16x16x4xf32, #tpu.memory_space<vmem>>, vector<1x8x16x4xf32>
    %31 = vector.shape_cast %30 : vector<1x8x16x4xf32> to vector<8x16x4xf32>
    %32 = vector.shape_cast %28 : vector<8x16x4xf32> to vector<1x8x16x4xf32>
    tpu.vector_store %arg5[%c0_9, %29, %c0_10, %c0_11], %32 {strides = array<i32>} : memref<1x16x16x4xf32, #tpu.memory_space<vmem>>, vector<1x8x16x4xf32>,
    %c0_i32 = arith.constant 0 : i32
    %33 = arith.cmpi eq, %arg1, %c0_i32 : i32
    %34 = arith.extui %33 : i1 to i32
    %c0_i32_12 = arith.constant 0 : i32
    %35 = arith.cmpi ne, %34, %c0_i32_12 : i32
    scf.if %35 {
      %cst_24 = arith.constant 0.000000e+00 : f32
      %50 = vector.broadcast %cst_24 : f32 to vector<1x4xf32>
      %c0_25 = arith.constant 0 : index
      %c0_26 = arith.constant 0 : index
      %51 = vector.load %arg6[%c0_25, %c0_26] : memref<1x4xf32, #tpu.memory_space<vmem>>, vector<1x4xf32>
      tpu.vector_store %arg6[%c0_25, %c0_26], %50 {strides = array<i32>} : memref<1x4xf32, #tpu.memory_space<vmem>>, vector<1x4xf32>,
      %cst_27 = arith.constant 0.000000e+00 : f32
      %52 = vector.broadcast %cst_27 : f32 to vector<1x4xf32>
      %c0_28 = arith.constant 0 : index
      %c0_29 = arith.constant 0 : index
      %53 = vector.load %arg7[%c0_28, %c0_29] : memref<1x4xf32, #tpu.memory_space<vmem>>, vector<1x4xf32>
      tpu.vector_store %arg7[%c0_28, %c0_29], %52 {strides = array<i32>} : memref<1x4xf32, #tpu.memory_space<vmem>>, vector<1x4xf32>,
    } else {
    }
    %c0_13 = arith.constant 0 : index
    %c0_14 = arith.constant 0 : index
    %36 = vector.load %arg6[%c0_13, %c0_14] : memref<1x4xf32, #tpu.memory_space<vmem>>, vector<1x4xf32>
    %cst_15 = arith.constant dense<0.000000e+00> : vector<4xf32>
    %37 = vector.multi_reduction <add>, %25, %cst_15 [0] : vector<128x4xf32> to vector<4xf32>
    %38 = vector.shape_cast %37 : vector<4xf32> to vector<1x4xf32>
    %39 = arith.addf %36, %38 : vector<1x4xf32>
    %c0_16 = arith.constant 0 : index
    %c0_17 = arith.constant 0 : index
    %40 = vector.load %arg6[%c0_16, %c0_17] : memref<1x4xf32, #tpu.memory_space<vmem>>, vector<1x4xf32>
    tpu.vector_store %arg6[%c0_16, %c0_17], %39 {strides = array<i32>} : memref<1x4xf32, #tpu.memory_space<vmem>>, vector<1x4xf32>,
    %c0_18 = arith.constant 0 : index
    %c0_19 = arith.constant 0 : index
    %41 = vector.load %arg7[%c0_18, %c0_19] : memref<1x4xf32, #tpu.memory_space<vmem>>, vector<1x4xf32>
    %42 = arith.mulf %25, %25 : vector<128x4xf32>
    %cst_20 = arith.constant dense<0.000000e+00> : vector<4xf32>
    %43 = vector.multi_reduction <add>, %42, %cst_20 [0] : vector<128x4xf32> to vector<4xf32>
    %44 = vector.shape_cast %43 : vector<4xf32> to vector<1x4xf32>
    %45 = arith.addf %41, %44 : vector<1x4xf32>
    %c0_21 = arith.constant 0 : index
    %c0_22 = arith.constant 0 : index
    %46 = vector.load %arg7[%c0_21, %c0_22] : memref<1x4xf32, #tpu.memory_space<vmem>>, vector<1x4xf32>
    tpu.vector_store %arg7[%c0_21, %c0_22], %45 {strides = array<i32>} : memref<1x4xf32, #tpu.memory_space<vmem>>, vector<1x4xf32>,
    %c1_i32 = arith.constant 1 : i32
    %47 = arith.cmpi eq, %arg1, %c1_i32 : i32
    %48 = arith.extui %47 : i1 to i32
    %c0_i32_23 = arith.constant 0 : i32
    %49 = arith.cmpi ne, %48, %c0_i32_23 : i32
    scf.if %49 {
      %c0_24 = arith.constant 0 : index
      %c0_25 = arith.constant 0 : index
      %50 = vector.load %arg6[%c0_24, %c0_25] : memref<1x4xf32, #tpu.memory_space<vmem>>, vector<1x4xf32>
      %cst_26 = arith.constant 3.906250e-03 : f32
      %51 = vector.broadcast %cst_26 : f32 to vector<1x4xf32>
      %52 = arith.mulf %50, %51 : vector<1x4xf32>
      %c0_27 = arith.constant 0 : index
      %c0_28 = arith.constant 0 : index
      %53 = vector.load %arg7[%c0_27, %c0_28] : memref<1x4xf32, #tpu.memory_space<vmem>>, vector<1x4xf32>
      %cst_29 = arith.constant 3.906250e-03 : f32
      %54 = vector.broadcast %cst_29 : f32 to vector<1x4xf32>
      %55 = arith.mulf %53, %54 : vector<1x4xf32>
      %56 = arith.mulf %52, %52 : vector<1x4xf32>
      %57 = arith.subf %55, %56 : vector<1x4xf32>
      %cst_30 = arith.constant 9.99999974E-6 : f32
      %58 = vector.broadcast %cst_30 : f32 to vector<1x4xf32>
      %59 = arith.addf %57, %58 : vector<1x4xf32>
      %60 = math.rsqrt %59 : vector<1x4xf32>
      %c0_31 = arith.constant 0 : index
      %c0_32 = arith.constant 0 : index
      %c0_33 = arith.constant 0 : index
      %c0_34 = arith.constant 0 : index
      %61 = vector.load %arg5[%c0_31, %c0_32, %c0_33, %c0_34] : memref<1x16x16x4xf32, #tpu.memory_space<vmem>>, vector<1x16x16x4xf32>
      %62 = vector.shape_cast %61 : vector<1x16x16x4xf32> to vector<16x16x4xf32>
      %63 = vector.shape_cast %62 : vector<16x16x4xf32> to vector<256x4xf32>
      %64 = vector.broadcast %52 : vector<1x4xf32> to vector<256x4xf32>
      %65 = arith.subf %63, %64 : vector<256x4xf32>
      %66 = vector.broadcast %60 : vector<1x4xf32> to vector<256x4xf32>
      %67 = arith.mulf %65, %66 : vector<256x4xf32>
      %cst_35 = arith.constant 0.000000e+00 : f32
      %68 = vector.broadcast %cst_35 : f32 to vector<256x4xf32>
      %69 = arith.maximumf %67, %68 : vector<256x4xf32>
      %70 = vector.shape_cast %69 : vector<256x4xf32> to vector<16x16x4xf32>
      %c0_36 = arith.constant 0 : index
      %c0_37 = arith.constant 0 : index
      %c0_38 = arith.constant 0 : index
      %c0_39 = arith.constant 0 : index
      %71 = vector.load %arg5[%c0_36, %c0_37, %c0_38, %c0_39] : memref<1x16x16x4xf32, #tpu.memory_space<vmem>>, vector<1x16x16x4xf32>
      %72 = vector.shape_cast %71 : vector<1x16x16x4xf32> to vector<16x16x4xf32>
      %73 = vector.shape_cast %70 : vector<16x16x4xf32> to vector<1x16x16x4xf32>
      tpu.vector_store %arg5[%c0_36, %c0_37, %c0_38, %c0_39], %73 {strides = array<i32>} : memref<1x16x16x4xf32, #tpu.memory_space<vmem>>, vector<1x16x16x4xf32>,
    } else {
    }
    return
  }
  func.func @transform_0(%arg0: i32, %arg1: i32) -> (i32, i32, i32, i32) {
    %c0_i32 = arith.constant 0 : i32
    %c0_i32_0 = arith.constant 0 : i32
    %c0_i32_1 = arith.constant 0 : i32
    return %arg0, %arg1, %c0_i32, %c0_i32_0 : i32, i32, i32, i32
  }
  func.func @transform_1(%arg0: i32, %arg1: i32) -> (i32, i32, i32, i32) {
    %c1_i32 = arith.constant 1 : i32
    %0 = arith.addi %arg1, %c1_i32 : i32
    %c4_i32 = arith.constant 4 : i32
    %1 = arith.muli %0, %c4_i32 : i32
    %c0_i32 = arith.constant 0 : i32
    %c0_i32_0 = arith.constant 0 : i32
    %c0_i32_1 = arith.constant 0 : i32
    return %arg0, %1, %c0_i32, %c0_i32_0 : i32, i32, i32, i32
  }
  func.func @transform_2(%arg0: i32, %arg1: i32) -> (i32, i32) {
    %c0_i32 = arith.constant 0 : i32
    %c0_i32_0 = arith.constant 0 : i32
    %c0_i32_1 = arith.constant 0 : i32
    return %c0_i32, %c0_i32_0 : i32, i32
  }
  func.func @transform_3(%arg0: i32, %arg1: i32) -> (i32, i32, i32, i32) {
    %c0_i32 = arith.constant 0 : i32
    %c0_i32_0 = arith.constant 0 : i32
    %c0_i32_1 = arith.constant 0 : i32
    %c0_i32_2 = arith.constant 0 : i32
    return %arg0, %c0_i32, %c0_i32_0, %c0_i32_1 : i32, i32, i32, i32
  }
}

</mosaic_0001>

<llo_original>
// kernel: tpu_custom_call.1
$region0: #{tpu_custom_call.1}
  #allocation0 [shape = 'u32[]', space=smem, size = 0x4, offset = 0x4, fixed_abs, tag = 'smem constant byte address 0x4 - core index']
  #allocation1 [shape = 'u32[144,128]{1,0:T(1,128)}', space=vmem, size = 0x12000, scoped, tag = 'internal scratch']
  #allocation2 [shape = 'f32[1,4]{1,0:T(1,128)}', space=vmem, size = 0x200, scoped, tag = 'scratch operand']
  #allocation3 [shape = 'f32[1,4]{1,0:T(1,128)}', space=vmem, size = 0x200, scoped, tag = 'scratch operand']
  %s0 = inlined_call_operand.vmem [shape: f32[2,18,18,4], index: 0, kind: input, shape index: {}]
  %s1 = inlined_call_operand.vmem [shape: f32[2,18,18,4], index: 1, kind: input, shape index: {}]
  %s2 = inlined_call_operand.vmem [shape: f32[36,4], index: 2, kind: input, shape index: {}]
  %s3 = inlined_call_operand.vmem [shape: f32[2,16,16,4], index: 3, kind: output, shape index: {}]
  %s4 = sld [smem:[#allocation0]]
  $region53: #{tpu_custom_call.1} parent=0
    _
  %s6 = ssub.s32 1, %s4
  %s7 = scalar_select 0, %s6, %s4
  loop: start=0, step=1, limit=6
  $region2: #{tpu_custom_call.1} parent=0 // loop_pre_header
    _
  $region3: #{tpu_custom_call.1} parent=0 // loop_header
    %s9 = sphi 0, %s13
    %p10 = scmp.ge.s32.totalorder %s9, 6
    %s16 = sphi 0, %s28
    %s17 = sphi 0, %s24
    %s18 = sphi 0, %s16
    %s19 = sphi 0, %s17
    %s20 = sphi 0, %s18
    %s21 = sphi 0, %s19
    %s33 = sphi 0, %s35
    %s36 = sphi 0, %s33
    %s37 = sphi 0, %s36
    %s53 = sphi 0, %s37
    %s65 = sphi 0, %s67
    %s68 = sphi 0, %s65
    %s69 = sphi 0, %s68
    %s85 = sphi 0, %s69
    %s89 = sphi 0, %s89
    %s91 = sphi 0, %s89
    %s92 = sphi 0, %s91
    %s106 = sphi 0, %s92
    %s112 = sphi 0, %s114
    %s115 = sphi 0, %s112
    %s116 = sphi 0, %s115
    %s132 = sphi 0, %s116
  $region4: #{tpu_custom_call.1} parent=0 // loop_header_branch
    %12 = sbr.rel (%p10) target = $region8
  $region5: #{tpu_custom_call.1} parent=0 // loop_body
    %s14 = ssub.s32 %s9, 1
    %s15 = ssub.s32 %s9, 2
    %s22 = sadd.s32 1, %s17
    %p23 = scmp.ge.s32.totalorder %s22, 2
    %s24 = scalar_select %p23, 0, %s22
    %s25 = sadd.s32 1, %s16
    %s26 = scalar_select %p23, %s25, %s16
    %p27 = scmp.ge.s32.totalorder %s26, 2
    %s28 = scalar_select %p27, 0, %s26
    %s29 = ssub.s32 %s16, %s28
    %s30 = ssub.s32 %s17, %s24
    %s31 = sor.u32 %s29, %s30
    %p32 = scmp.eq.s32.totalorder %s31, 0
    %s34 = sadd.s32 %s33, 1
    %s35 = scalar_select %p32, %s33, %s34
    %p38 = pneg %p32
    %p39 = scmp.eq.s32.totalorder %s9, 3
    %p40 = por %p38, %p39
    %p41 = scmp.ne.s32.totalorder %s33, %s36
    %p42 = scmp.eq.s32.totalorder %s9, 0
    %p43 = por %p41, %p42
    %p44 = scmp.ne.s32.totalorder %s33, %s36
    %p45 = scmp.eq.s32.totalorder %s14, 3
    %p46 = por %p44, %p45
    %p47 = scmp.ne.s32.totalorder %s36, %s37
    %p48 = scmp.eq.s32.totalorder %s14, 0
    %p49 = por %p47, %p48
    %p50 = scmp.ne.s32.totalorder %s36, %s37
    %p51 = scmp.eq.s32.totalorder %s15, 3
    %p52 = por %p50, %p51
    %p54 = scmp.ne.s32.totalorder %s37, %s53
    %p55 = scmp.eq.s32.totalorder %s15, 0
    %p56 = por %p54, %p55
    %s57 = sadd.s32 %s17, 1
    %s58 = smul.u32 %s57, 4
    %s59 = sadd.s32 %s24, 1
    %s60 = smul.u32 %s59, 4
    %s61 = ssub.s32 %s16, %s28
    %s62 = ssub.s32 %s58, %s60
    %s63 = sor.u32 %s61, %s62
    %p64 = scmp.eq.s32.totalorder %s63, 0
    %s66 = sadd.s32 %s65, 1
    %s67 = scalar_select %p64, %s65, %s66
    %p70 = pneg %p64
    %p71 = scmp.eq.s32.totalorder %s9, 3
    %p72 = por %p70, %p71
    %p73 = scmp.ne.s32.totalorder %s65, %s68
    %p74 = scmp.eq.s32.totalorder %s9, 0
    %p75 = por %p73, %p74
    %p76 = scmp.ne.s32.totalorder %s65, %s68
    %p77 = scmp.eq.s32.totalorder %s14, 3
    %p78 = por %p76, %p77
    %p79 = scmp.ne.s32.totalorder %s68, %s69
    %p80 = scmp.eq.s32.totalorder %s14, 0
    %p81 = por %p79, %p80
    %p82 = scmp.ne.s32.totalorder %s68, %s69
    %p83 = scmp.eq.s32.totalorder %s15, 3
    %p84 = por %p82, %p83
    %p86 = scmp.ne.s32.totalorder %s69, %s85
    %p87 = scmp.eq.s32.totalorder %s15, 0
    %p88 = por %p86, %p87
    %s90 = sadd.s32 %s89, 1
    %p93 = scmp.eq.s32.totalorder %s9, 3
    %p94 = scmp.ne.s32.totalorder %s89, %s91
    %p95 = scmp.eq.s32.totalorder %s9, 0
    %p96 = por %p94, %p95
    %p97 = scmp.ne.s32.totalorder %s89, %s91
    %p98 = scmp.eq.s32.totalorder %s14, 3
    %p99 = por %p97, %p98
    %p100 = scmp.ne.s32.totalorder %s91, %s92
    %p101 = scmp.eq.s32.totalorder %s14, 0
    %p102 = por %p100, %p101
    %p103 = scmp.ne.s32.totalorder %s91, %s92
    %p104 = scmp.eq.s32.totalorder %s15, 3
    %p105 = por %p103, %p104
    %p107 = scmp.ne.s32.totalorder %s92, %s106
    %p108 = scmp.eq.s32.totalorder %s15, 0
    %p109 = por %p107, %p108
    %s110 = ssub.s32 %s16, %s28
    %p111 = scmp.eq.s32.totalorder %s110, 0
    %s113 = sadd.s32 %s112, 1
    %s114 = scalar_select %p111, %s112, %s113
    %p117 = pneg %p111
    %p118 = scmp.eq.s32.totalorder %s9, 3
    %p119 = por %p117, %p118
    %p120 = scmp.ne.s32.totalorder %s112, %s115
    %p121 = scmp.eq.s32.totalorder %s9, 0
    %p122 = por %p120, %p121
    %p123 = scmp.ne.s32.totalorder %s112, %s115
    %p124 = scmp.eq.s32.totalorder %s14, 3
    %p125 = por %p123, %p124
    %p126 = scmp.ne.s32.totalorder %s115, %s116
    %p127 = scmp.eq.s32.totalorder %s14, 0
    %p128 = por %p126, %p127
    %p129 = scmp.ne.s32.totalorder %s115, %s116
    %p130 = scmp.eq.s32.totalorder %s15, 3
    %p131 = por %p129, %p130
    %p133 = scmp.ne.s32.totalorder %s116, %s132
    %p134 = scmp.eq.s32.totalorder %s15, 0
    %p135 = por %p133, %p134
    %p136 = scmp.le.s32.totalorder 1, %s9
    %p137 = scmp.lt.s32.totalorder %s9, 5
    %p138 = pnand %p136, %p137
    %p139 = pneg %p138
    // Predicated region
    $region9: #{tpu_custom_call.1} parent=5 // pred_check
      _
    $region10: #{tpu_custom_call.1} parent=5 // pred_check_branch
      %141 = sbr.rel (%p138) target = $region12
    $region11: #{tpu_custom_call.1} parent=5 // pred_region
      %s142 = ssub.s32 %s9, 1
      // Predicated region
      $region13: #{tpu_custom_call.1} parent=11 // pred_check
        %p143 = pneg %p102
      $region14: #{tpu_custom_call.1} parent=11 // pred_check_branch
        %145 = sbr.rel (%p143) target = $region16
      $region15: #{tpu_custom_call.1} parent=11 // pred_region
        _
      $region16: #{tpu_custom_call.1} parent=11 // pred_fallthru
        _
    $region12: #{tpu_custom_call.1} parent=5 // pred_fallthru
      _
    %p146 = scmp.lt.s32.totalorder %s9, 4
    // Predicated region
    $region17: #{tpu_custom_call.1} parent=5 // pred_check
      %p147 = pneg %p146
    $region18: #{tpu_custom_call.1} parent=5 // pred_check_branch
      %149 = sbr.rel (%p147) target = $region20
    $region19: #{tpu_custom_call.1} parent=5 // pred_region
      // Predicated region
      $region21: #{tpu_custom_call.1} parent=19 // pred_check
        %p150 = pneg %p43
      $region22: #{tpu_custom_call.1} parent=19 // pred_check_branch
        %152 = sbr.rel (%p150) target = $region24
      $region23: #{tpu_custom_call.1} parent=19 // pred_region
        %s153 = smul.u32 8, %s17
        %s154 = ssub.s32 18, %s153
        %p155 = scmp.lt.s32.totalorder %s154, 8
        %s156 = scalar_select %p155, %s154, 8
        %s157 = smul.u32 128, %s156
        %s158 = smul.u32 %s157, 3
        %p159 = scmp.lt.s32.totalorder %s16, 1
        %s160 = scalar_select %p159, %s16, 1
        %p161 = scmp.lt.s32.totalorder %s153, 17
        %s162 = scalar_select %p161, %s153, 17
        %s163 = smul.addr %s162, 3
        %s164 = smul.addr %s160, 54
        %s165 = sadd.s32 %s163, %s164
        %s166 = smul.addr %s165, 8
        %s167 = scalar_lea.vmem %s0, %s166
        %s168 = smul.u32 8, %s17
        %s169 = ssub.s32 18, %s168
        %p170 = scmp.lt.s32.totalorder %s169, 8
        %s171 = scalar_select %p170, %s169, 8
        %s172 = smul.u32 128, %s171
        %s173 = smul.u32 %s172, 3
      $region24: #{tpu_custom_call.1} parent=19 // pred_fallthru
        _
      // Predicated region
      $region25: #{tpu_custom_call.1} parent=19 // pred_check
        %p174 = pneg %p75
      $region26: #{tpu_custom_call.1} parent=19 // pred_check_branch
        %176 = sbr.rel (%p174) target = $region28
      $region27: #{tpu_custom_call.1} parent=19 // pred_region
        %s177 = sadd.s32 %s17, 1
        %s178 = smul.u32 %s177, 4
        %s179 = smul.u32 2, %s178
        %p180 = scmp.lt.s32.totalorder %s16, 1
        %s181 = scalar_select %p180, %s16, 1
        %p182 = scmp.lt.s32.totalorder %s179, 17
        %s183 = scalar_select %p182, %s179, 17
        %s184 = smul.addr %s183, 3
        %s185 = smul.addr %s181, 54
        %s186 = sadd.s32 %s184, %s185
        %s187 = smul.addr %s186, 8
        %s188 = scalar_lea.vmem %s1, %s187
        %s189 = sadd.s32 %s17, 1
        %s190 = smul.u32 %s189, 4
        %s191 = smul.u32 2, %s190
      $region28: #{tpu_custom_call.1} parent=19 // pred_fallthru
        _
    $region20: #{tpu_custom_call.1} parent=5 // pred_fallthru
      _
    %p192 = scmp.le.s32.totalorder 1, %s9
    %p193 = scmp.lt.s32.totalorder %s9, 5
    %p194 = pnand %p192, %p193
    %p195 = pneg %p194
    // Predicated region
    $region29: #{tpu_custom_call.1} parent=5 // pred_check
      _
    $region30: #{tpu_custom_call.1} parent=5 // pred_check_branch
      %197 = sbr.rel (%p194) target = $region32
    $region31: #{tpu_custom_call.1} parent=5 // pred_region
      %s198 = ssub.s32 %s9, 1
      %s199 = smul.u32 8, %s19
      %s200 = ssub.s32 18, %s199
      %p201 = scmp.lt.s32.totalorder %s200, 8
      %s202 = scalar_select %p201, %s200, 8
      %s203 = smul.u32 128, %s202
      %s204 = smul.u32 %s203, 3
      %p205 = scmp.lt.s32.totalorder %s18, 1
      %s206 = scalar_select %p205, %s18, 1
      %p207 = scmp.lt.s32.totalorder %s199, 17
      %s208 = scalar_select %p207, %s199, 17
      %s209 = smul.addr %s208, 3
      %s210 = smul.addr %s206, 54
      %s211 = sadd.s32 %s209, %s210
      %s212 = smul.addr %s211, 8
      %s213 = scalar_lea.vmem %s0, %s212
      %p214 = pneg %p49
      %p215 = pneg %p46
      %s216 = sadd.s32 %s19, 1
      %s217 = smul.u32 %s216, 4
      %s218 = smul.u32 2, %s217
      %p219 = scmp.lt.s32.totalorder %s18, 1
      %s220 = scalar_select %p219, %s18, 1
      %p221 = scmp.lt.s32.totalorder %s218, 17
      %s222 = scalar_select %p221, %s218, 17
      %s223 = smul.addr %s222, 3
      %s224 = smul.addr %s220, 54
      %s225 = sadd.s32 %s223, %s224
      %s226 = smul.addr %s225, 8
      %s227 = scalar_lea.vmem %s1, %s226
      %p228 = pneg %p81
      %p229 = pneg %p78
      %p230 = pneg %p102
      %p231 = pneg %p99
      %p232 = pneg %p128
      %p233 = pneg %p125
      %p234 = scmp.lt.s32.totalorder %s18, 1
      %s235 = scalar_select %p234, %s18, 1
      %s236 = smul.addr %s235, 32
      %s237 = smul.addr %s236, 8
      %s238 = scalar_lea.vmem %s3, %s237
      %s239 = smul.u32 8, %s19
      %s240 = ssub.s32 18, %s239
      %p241 = scmp.lt.s32.totalorder %s240, 8
      %s242 = scalar_select %p241, %s240, 8
      %s243 = smul.u32 128, %s242
      %s244 = smul.u32 %s243, 3
      %p245 = scmp.lt.s32.totalorder %s18, 1
      %s246 = scalar_select %p245, %s18, 1
      %p247 = scmp.lt.s32.totalorder %s239, 17
      %s248 = scalar_select %p247, %s239, 17
      %s249 = smul.addr %s248, 3
      %s250 = smul.addr %s246, 54
      %s251 = sadd.s32 %s249, %s250
      %s252 = smul.addr %s251, 8
      %s253 = scalar_lea.vmem %s0, %s252
      %s254 = smul.u32 8, %s19
      %s255 = ssub.s32 18, %s254
      %p256 = scmp.lt.s32.totalorder %s255, 8
      %s257 = scalar_select %p256, %s255, 8
      %s258 = smul.u32 128, %s257
      %s259 = smul.u32 %s258, 3
      %s260 = sadd.s32 %s19, 1
      %s261 = smul.u32 %s260, 4
      %s262 = smul.u32 2, %s261
      %p263 = scmp.lt.s32.totalorder %s18, 1
      %s264 = scalar_select %p263, %s18, 1
      %p265 = scmp.lt.s32.totalorder %s262, 17
      %s266 = scalar_select %p265, %s262, 17
      %s267 = smul.addr %s266, 3
      %s268 = smul.addr %s264, 54
      %s269 = sadd.s32 %s267, %s268
      %s270 = smul.addr %s269, 8
      %s271 = scalar_lea.vmem %s1, %s270
      %s272 = sadd.s32 %s19, 1
      %s273 = smul.u32 %s272, 4
      %s274 = smul.u32 2, %s273
      %p275 = scmp.lt.s32.totalorder %s18, 1
      %s276 = scalar_select %p275, %s18, 1
      %s277 = smul.addr %s276, 32
      %s278 = smul.addr %s277, 8
      %s279 = scalar_lea.vmem %s3, %s278
      %v280 = vld [vmem:[%s253] sm:$0xff]
      %v281 = vld [vmem:[%s253 + $0x8] sm:$0xff]
      %v282 = vld [vmem:[%s253 + $0x10] sm:$0x3]
      %v283 = vld [vmem:[%s253 + $0x18] sm:$0xff]
      %v284 = vld [vmem:[%s253 + $0x20] sm:$0xff]
      %v285 = vld [vmem:[%s253 + $0x28] sm:$0x3]
      %v286 = vld [vmem:[%s253 + $0x30] sm:$0xff]
      %v287 = vld [vmem:[%s253 + $0x38] sm:$0xff]
      %v288 = vld [vmem:[%s253 + $0x40] sm:$0x3]
      %v289 = vld [vmem:[%s253 + $0x48] sm:$0xff]
      %v290 = vld [vmem:[%s253 + $0x50] sm:$0xff]
      %v291 = vld [vmem:[%s253 + $0x58] sm:$0x3]
      %v292 = vld [vmem:[%s253 + $0x60] sm:$0xff]
      %v293 = vld [vmem:[%s253 + $0x68] sm:$0xff]
      %v294 = vld [vmem:[%s253 + $0x70] sm:$0x3]
      %v295 = vld [vmem:[%s253 + $0x78] sm:$0xff]
      %v296 = vld [vmem:[%s253 + $0x80] sm:$0xff]
      %v297 = vld [vmem:[%s253 + $0x88] sm:$0x3]
      %v298 = vld [vmem:[%s253 + $0x90] sm:$0xff]
      %v299 = vld [vmem:[%s253 + $0x98] sm:$0xff]
      %v300 = vld [vmem:[%s253 + $0xa0] sm:$0x3]
      %v301 = vld [vmem:[%s253 + $0xa8] sm:$0xff]
      %v302 = vld [vmem:[%s253 + $0xb0] sm:$0xff]
      %v303 = vld [vmem:[%s253 + $0xb8] sm:$0x3]
      %v304 = vld [vmem:[%s271] sm:$0xff]
      %v305 = vld [vmem:[%s271 + $0x8] sm:$0xff]
      %v306 = vld [vmem:[%s271 + $0x10] sm:$0x3]
      %v307 = vld [vmem:[%s271 + $0x18] sm:$0xff]
      %v308 = vld [vmem:[%s271 + $0x20] sm:$0xff]
      %v309 = vld [vmem:[%s271 + $0x28] sm:$0x3]
      %vm334 = vcmask 1046528
      %v335 = vrot.slane %v280, 1
      %v336 = vrot.slane %v281, 1
      %v337 = vsel %vm334, %v335, %v336
      %v338 = vrot.slane %v282, 1
      %v339 = vsel %vm334, %v336, %v338
      %v340 = vrot.slane %v283, 1
      %v341 = vrot.slane %v284, 1
      %v342 = vsel %vm334, %v340, %v341
      %v343 = vrot.slane %v285, 1
      %v344 = vsel %vm334, %v341, %v343
      %v345 = vrot.slane %v286, 1
      %v346 = vrot.slane %v287, 1
      %v347 = vsel %vm334, %v345, %v346
      %v348 = vrot.slane %v288, 1
      %v349 = vsel %vm334, %v346, %v348
      %v350 = vrot.slane %v289, 1
      %v351 = vrot.slane %v290, 1
      %v352 = vsel %vm334, %v350, %v351
      %v353 = vrot.slane %v291, 1
      %v354 = vsel %vm334, %v351, %v353
      %v355 = vrot.slane %v292, 1
      %v356 = vrot.slane %v293, 1
      %v357 = vsel %vm334, %v355, %v356
      %v358 = vrot.slane %v294, 1
      %v359 = vsel %vm334, %v356, %v358
      %v360 = vrot.slane %v295, 1
      %v361 = vrot.slane %v296, 1
      %v362 = vsel %vm334, %v360, %v361
      %v363 = vrot.slane %v297, 1
      %v364 = vsel %vm334, %v361, %v363
      %v365 = vrot.slane %v298, 1
      %v366 = vrot.slane %v299, 1
      %v367 = vsel %vm334, %v365, %v366
      %v368 = vrot.slane %v300, 1
      %v369 = vsel %vm334, %v366, %v368
      %v370 = vrot.slane %v301, 1
      %v371 = vrot.slane %v302, 1
      %v372 = vsel %vm334, %v370, %v371
      %v373 = vrot.slane %v303, 1
      %v374 = vsel %vm334, %v371, %v373
      %vm375 = vcmask 1045504
      %v376 = vrot.slane %v280, 2
      %v377 = vrot.slane %v281, 2
      %v378 = vsel %vm375, %v376, %v377
      %v379 = vrot.slane %v282, 2
      %v380 = vsel %vm375, %v377, %v379
      %v381 = vrot.slane %v283, 2
      %v382 = vrot.slane %v284, 2
      %v383 = vsel %vm375, %v381, %v382
      %v384 = vrot.slane %v285, 2
      %v385 = vsel %vm375, %v382, %v384
      %v386 = vrot.slane %v286, 2
      %v387 = vrot.slane %v287, 2
      %v388 = vsel %vm375, %v386, %v387
      %v389 = vrot.slane %v288, 2
      %v390 = vsel %vm375, %v387, %v389
      %v391 = vrot.slane %v289, 2
      %v392 = vrot.slane %v290, 2
      %v393 = vsel %vm375, %v391, %v392
      %v394 = vrot.slane %v291, 2
      %v395 = vsel %vm375, %v392, %v394
      %v396 = vrot.slane %v292, 2
      %v397 = vrot.slane %v293, 2
      %v398 = vsel %vm375, %v396, %v397
      %v399 = vrot.slane %v294, 2
      %v400 = vsel %vm375, %v397, %v399
      %v401 = vrot.slane %v295, 2
      %v402 = vrot.slane %v296, 2
      %v403 = vsel %vm375, %v401, %v402
      %v404 = vrot.slane %v297, 2
      %v405 = vsel %vm375, %v402, %v404
      %v406 = vrot.slane %v298, 2
      %v407 = vrot.slane %v299, 2
      %v408 = vsel %vm375, %v406, %v407
      %v409 = vrot.slane %v300, 2
      %v410 = vsel %vm375, %v407, %v409
      %v411 = vrot.slane %v301, 2
      %v412 = vrot.slane %v302, 2
      %v413 = vsel %vm375, %v411, %v412
      %v414 = vrot.slane %v303, 2
      %v415 = vsel %vm375, %v412, %v414
      %v419 = vrot.slane %v304, 1
      %v420 = vrot.slane %v305, 1
      %v421 = vsel %vm334, %v419, %v420
      %v422 = vrot.slane %v306, 1
      %v423 = vsel %vm334, %v420, %v422
      %v424 = vrot.slane %v304, 2
      %v425 = vrot.slane %v305, 2
      %v426 = vsel %vm375, %v424, %v425
      %v427 = vrot.slane %v306, 2
      %v428 = vsel %vm375, %v425, %v427
      %v432 = vrot.slane %v307, 1
      %v433 = vrot.slane %v308, 1
      %v434 = vsel %vm334, %v432, %v433
      %v435 = vrot.slane %v309, 1
      %v436 = vsel %vm334, %v433, %v435
      %v437 = vrot.slane %v307, 2
      %v438 = vrot.slane %v308, 2
      %v439 = vsel %vm375, %v437, %v438
      %v440 = vrot.slane %v309, 2
      %v441 = vsel %vm375, %v438, %v440
      %442 = vrot.lane.b32.xlu0 %v337, 4
      %v443 = vpop.permute.xlu0 %442
      %444 = vrot.lane.b32.xlu0 %v339, 4
      %v445 = vpop.permute.xlu0 %444
      %446 = vrot.lane.b32.xlu0 %v342, 4
      %v447 = vpop.permute.xlu0 %446
      %448 = vrot.lane.b32.xlu0 %v344, 4
      %v449 = vpop.permute.xlu0 %448
      %450 = vrot.lane.b32.xlu0 %v347, 4
      %v451 = vpop.permute.xlu0 %450
      %452 = vrot.lane.b32.xlu0 %v349, 4
      %v453 = vpop.permute.xlu0 %452
      %454 = vrot.lane.b32.xlu0 %v352, 4
      %v455 = vpop.permute.xlu0 %454
      %456 = vrot.lane.b32.xlu0 %v354, 4
      %v457 = vpop.permute.xlu0 %456
      %458 = vrot.lane.b32.xlu0 %v357, 4
      %v459 = vpop.permute.xlu0 %458
      %460 = vrot.lane.b32.xlu0 %v359, 4
      %v461 = vpop.permute.xlu0 %460
      %462 = vrot.lane.b32.xlu0 %v362, 4
      %v463 = vpop.permute.xlu0 %462
      %464 = vrot.lane.b32.xlu0 %v364, 4
      %v465 = vpop.permute.xlu0 %464
      %466 = vrot.lane.b32.xlu0 %v367, 4
      %v467 = vpop.permute.xlu0 %466
      %468 = vrot.lane.b32.xlu0 %v369, 4
      %v469 = vpop.permute.xlu0 %468
      %470 = vrot.lane.b32.xlu0 %v372, 4
      %v471 = vpop.permute.xlu0 %470
      %472 = vrot.lane.b32.xlu0 %v374, 4
      %v473 = vpop.permute.xlu0 %472
      %490 = vrot.lane.b32.xlu0 %v378, 8
      %v491 = vpop.permute.xlu0 %490
      %492 = vrot.lane.b32.xlu0 %v380, 8
      %v493 = vpop.permute.xlu0 %492
      %494 = vrot.lane.b32.xlu0 %v383, 8
      %v495 = vpop.permute.xlu0 %494
      %496 = vrot.lane.b32.xlu0 %v385, 8
      %v497 = vpop.permute.xlu0 %496
      %498 = vrot.lane.b32.xlu0 %v388, 8
      %v499 = vpop.permute.xlu0 %498
      %500 = vrot.lane.b32.xlu0 %v390, 8
      %v501 = vpop.permute.xlu0 %500
      %502 = vrot.lane.b32.xlu0 %v393, 8
      %v503 = vpop.permute.xlu0 %502
      %504 = vrot.lane.b32.xlu0 %v395, 8
      %v505 = vpop.permute.xlu0 %504
      %506 = vrot.lane.b32.xlu0 %v398, 8
      %v507 = vpop.permute.xlu0 %506
      %508 = vrot.lane.b32.xlu0 %v400, 8
      %v509 = vpop.permute.xlu0 %508
      %510 = vrot.lane.b32.xlu0 %v403, 8
      %v511 = vpop.permute.xlu0 %510
      %512 = vrot.lane.b32.xlu0 %v405, 8
      %v513 = vpop.permute.xlu0 %512
      %514 = vrot.lane.b32.xlu0 %v408, 8
      %v515 = vpop.permute.xlu0 %514
      %516 = vrot.lane.b32.xlu0 %v410, 8
      %v517 = vpop.permute.xlu0 %516
      %518 = vrot.lane.b32.xlu0 %v413, 8
      %v519 = vpop.permute.xlu0 %518
      %520 = vrot.lane.b32.xlu0 %v415, 8
      %v521 = vpop.permute.xlu0 %520
      %538 = vrot.lane.b32.xlu0 %v283, 12
      %v539 = vpop.permute.xlu0 %538
      %540 = vrot.lane.b32.xlu0 %v284, 12
      %v541 = vpop.permute.xlu0 %540
      %542 = vrot.lane.b32.xlu0 %v286, 12
      %v543 = vpop.permute.xlu0 %542
      %544 = vrot.lane.b32.xlu0 %v287, 12
      %v545 = vpop.permute.xlu0 %544
      %546 = vrot.lane.b32.xlu0 %v289, 12
      %v547 = vpop.permute.xlu0 %546
      %548 = vrot.lane.b32.xlu0 %v290, 12
      %v549 = vpop.permute.xlu0 %548
      %550 = vrot.lane.b32.xlu0 %v292, 12
      %v551 = vpop.permute.xlu0 %550
      %552 = vrot.lane.b32.xlu0 %v293, 12
      %v553 = vpop.permute.xlu0 %552
      %554 = vrot.lane.b32.xlu0 %v295, 12
      %v555 = vpop.permute.xlu0 %554
      %556 = vrot.lane.b32.xlu0 %v296, 12
      %v557 = vpop.permute.xlu0 %556
      %558 = vrot.lane.b32.xlu0 %v298, 12
      %v559 = vpop.permute.xlu0 %558
      %560 = vrot.lane.b32.xlu0 %v299, 12
      %v561 = vpop.permute.xlu0 %560
      %562 = vrot.lane.b32.xlu0 %v301, 12
      %v563 = vpop.permute.xlu0 %562
      %564 = vrot.lane.b32.xlu0 %v302, 12
      %v565 = vpop.permute.xlu0 %564
      %566 = vrot.lane.b32.xlu0 %v304, 12
      %v567 = vpop.permute.xlu0 %566
      %568 = vrot.lane.b32.xlu0 %v305, 12
      %v569 = vpop.permute.xlu0 %568
      %586 = vrot.lane.b32.xlu0 %v342, 16
      %v587 = vpop.permute.xlu0 %586
      %588 = vrot.lane.b32.xlu0 %v344, 16
      %v589 = vpop.permute.xlu0 %588
      %590 = vrot.lane.b32.xlu0 %v347, 16
      %v591 = vpop.permute.xlu0 %590
      %592 = vrot.lane.b32.xlu0 %v349, 16
      %v593 = vpop.permute.xlu0 %592
      %594 = vrot.lane.b32.xlu0 %v352, 16
      %v595 = vpop.permute.xlu0 %594
      %596 = vrot.lane.b32.xlu0 %v354, 16
      %v597 = vpop.permute.xlu0 %596
      %598 = vrot.lane.b32.xlu0 %v357, 16
      %v599 = vpop.permute.xlu0 %598
      %600 = vrot.lane.b32.xlu0 %v359, 16
      %v601 = vpop.permute.xlu0 %600
      %602 = vrot.lane.b32.xlu0 %v362, 16
      %v603 = vpop.permute.xlu0 %602
      %604 = vrot.lane.b32.xlu0 %v364, 16
      %v605 = vpop.permute.xlu0 %604
      %606 = vrot.lane.b32.xlu0 %v367, 16
      %v607 = vpop.permute.xlu0 %606
      %608 = vrot.lane.b32.xlu0 %v369, 16
      %v609 = vpop.permute.xlu0 %608
      %610 = vrot.lane.b32.xlu0 %v372, 16
      %v611 = vpop.permute.xlu0 %610
      %612 = vrot.lane.b32.xlu0 %v374, 16
      %v613 = vpop.permute.xlu0 %612
      %614 = vrot.lane.b32.xlu0 %v421, 16
      %v615 = vpop.permute.xlu0 %614
      %616 = vrot.lane.b32.xlu0 %v423, 16
      %v617 = vpop.permute.xlu0 %616
      %634 = vrot.lane.b32.xlu0 %v383, 20
      %v635 = vpop.permute.xlu0 %634
      %636 = vrot.lane.b32.xlu0 %v385, 20
      %v637 = vpop.permute.xlu0 %636
      %638 = vrot.lane.b32.xlu0 %v388, 20
      %v639 = vpop.permute.xlu0 %638
      %640 = vrot.lane.b32.xlu0 %v390, 20
      %v641 = vpop.permute.xlu0 %640
      %642 = vrot.lane.b32.xlu0 %v393, 20
      %v643 = vpop.permute.xlu0 %642
      %644 = vrot.lane.b32.xlu0 %v395, 20
      %v645 = vpop.permute.xlu0 %644
      %646 = vrot.lane.b32.xlu0 %v398, 20
      %v647 = vpop.permute.xlu0 %646
      %648 = vrot.lane.b32.xlu0 %v400, 20
      %v649 = vpop.permute.xlu0 %648
      %650 = vrot.lane.b32.xlu0 %v403, 20
      %v651 = vpop.permute.xlu0 %650
      %652 = vrot.lane.b32.xlu0 %v405, 20
      %v653 = vpop.permute.xlu0 %652
      %654 = vrot.lane.b32.xlu0 %v408, 20
      %v655 = vpop.permute.xlu0 %654
      %656 = vrot.lane.b32.xlu0 %v410, 20
      %v657 = vpop.permute.xlu0 %656
      %658 = vrot.lane.b32.xlu0 %v413, 20
      %v659 = vpop.permute.xlu0 %658
      %660 = vrot.lane.b32.xlu0 %v415, 20
      %v661 = vpop.permute.xlu0 %660
      %662 = vrot.lane.b32.xlu0 %v426, 20
      %v663 = vpop.permute.xlu0 %662
      %664 = vrot.lane.b32.xlu0 %v428, 20
      %v665 = vpop.permute.xlu0 %664
      %682 = vrot.lane.b32.xlu0 %v286, 24
      %v683 = vpop.permute.xlu0 %682
      %684 = vrot.lane.b32.xlu0 %v287, 24
      %v685 = vpop.permute.xlu0 %684
      %686 = vrot.lane.b32.xlu0 %v289, 24
      %v687 = vpop.permute.xlu0 %686
      %688 = vrot.lane.b32.xlu0 %v290, 24
      %v689 = vpop.permute.xlu0 %688
      %690 = vrot.lane.b32.xlu0 %v292, 24
      %v691 = vpop.permute.xlu0 %690
      %692 = vrot.lane.b32.xlu0 %v293, 24
      %v693 = vpop.permute.xlu0 %692
      %694 = vrot.lane.b32.xlu0 %v295, 24
      %v695 = vpop.permute.xlu0 %694
      %696 = vrot.lane.b32.xlu0 %v296, 24
      %v697 = vpop.permute.xlu0 %696
      %698 = vrot.lane.b32.xlu0 %v298, 24
      %v699 = vpop.permute.xlu0 %698
      %700 = vrot.lane.b32.xlu0 %v299, 24
      %v701 = vpop.permute.xlu0 %700
      %702 = vrot.lane.b32.xlu0 %v301, 24
      %v703 = vpop.permute.xlu0 %702
      %704 = vrot.lane.b32.xlu0 %v302, 24
      %v705 = vpop.permute.xlu0 %704
      %706 = vrot.lane.b32.xlu0 %v304, 24
      %v707 = vpop.permute.xlu0 %706
      %708 = vrot.lane.b32.xlu0 %v305, 24
      %v709 = vpop.permute.xlu0 %708
      %710 = vrot.lane.b32.xlu0 %v307, 24
      %v711 = vpop.permute.xlu0 %710
      %712 = vrot.lane.b32.xlu0 %v308, 24
      %v713 = vpop.permute.xlu0 %712
      %730 = vrot.lane.b32.xlu0 %v347, 28
      %v731 = vpop.permute.xlu0 %730
      %732 = vrot.lane.b32.xlu0 %v349, 28
      %v733 = vpop.permute.xlu0 %732
      %734 = vrot.lane.b32.xlu0 %v352, 28
      %v735 = vpop.permute.xlu0 %734
      %736 = vrot.lane.b32.xlu0 %v354, 28
      %v737 = vpop.permute.xlu0 %736
      %738 = vrot.lane.b32.xlu0 %v357, 28
      %v739 = vpop.permute.xlu0 %738
      %740 = vrot.lane.b32.xlu0 %v359, 28
      %v741 = vpop.permute.xlu0 %740
      %742 = vrot.lane.b32.xlu0 %v362, 28
      %v743 = vpop.permute.xlu0 %742
      %744 = vrot.lane.b32.xlu0 %v364, 28
      %v745 = vpop.permute.xlu0 %744
      %746 = vrot.lane.b32.xlu0 %v367, 28
      %v747 = vpop.permute.xlu0 %746
      %748 = vrot.lane.b32.xlu0 %v369, 28
      %v749 = vpop.permute.xlu0 %748
      %750 = vrot.lane.b32.xlu0 %v372, 28
      %v751 = vpop.permute.xlu0 %750
      %752 = vrot.lane.b32.xlu0 %v374, 28
      %v753 = vpop.permute.xlu0 %752
      %754 = vrot.lane.b32.xlu0 %v421, 28
      %v755 = vpop.permute.xlu0 %754
      %756 = vrot.lane.b32.xlu0 %v423, 28
      %v757 = vpop.permute.xlu0 %756
      %758 = vrot.lane.b32.xlu0 %v434, 28
      %v759 = vpop.permute.xlu0 %758
      %760 = vrot.lane.b32.xlu0 %v436, 28
      %v761 = vpop.permute.xlu0 %760
      %778 = vrot.lane.b32.xlu0 %v388, 32
      %v779 = vpop.permute.xlu0 %778
      %780 = vrot.lane.b32.xlu0 %v390, 32
      %v781 = vpop.permute.xlu0 %780
      %782 = vrot.lane.b32.xlu0 %v393, 32
      %v783 = vpop.permute.xlu0 %782
      %784 = vrot.lane.b32.xlu0 %v395, 32
      %v785 = vpop.permute.xlu0 %784
      %786 = vrot.lane.b32.xlu0 %v398, 32
      %v787 = vpop.permute.xlu0 %786
      %788 = vrot.lane.b32.xlu0 %v400, 32
      %v789 = vpop.permute.xlu0 %788
      %790 = vrot.lane.b32.xlu0 %v403, 32
      %v791 = vpop.permute.xlu0 %790
      %792 = vrot.lane.b32.xlu0 %v405, 32
      %v793 = vpop.permute.xlu0 %792
      %794 = vrot.lane.b32.xlu0 %v408, 32
      %v795 = vpop.permute.xlu0 %794
      %796 = vrot.lane.b32.xlu0 %v410, 32
      %v797 = vpop.permute.xlu0 %796
      %798 = vrot.lane.b32.xlu0 %v413, 32
      %v799 = vpop.permute.xlu0 %798
      %800 = vrot.lane.b32.xlu0 %v415, 32
      %v801 = vpop.permute.xlu0 %800
      %802 = vrot.lane.b32.xlu0 %v426, 32
      %v803 = vpop.permute.xlu0 %802
      %804 = vrot.lane.b32.xlu0 %v428, 32
      %v805 = vpop.permute.xlu0 %804
      %806 = vrot.lane.b32.xlu0 %v439, 32
      %v807 = vpop.permute.xlu0 %806
      %808 = vrot.lane.b32.xlu0 %v441, 32
      %v809 = vpop.permute.xlu0 %808
      %vm826 = vcmask 31744
      %v827 = vsel %vm826, %v280, %v443
      %v828 = vsel %vm826, %v281, %v445
      %v829 = vsel %vm826, %v283, %v447
      %v830 = vsel %vm826, %v284, %v449
      %v831 = vsel %vm826, %v286, %v451
      %v832 = vsel %vm826, %v287, %v453
      %v833 = vsel %vm826, %v289, %v455
      %v834 = vsel %vm826, %v290, %v457
      %v835 = vsel %vm826, %v292, %v459
      %v836 = vsel %vm826, %v293, %v461
      %v837 = vsel %vm826, %v295, %v463
      %v838 = vsel %vm826, %v296, %v465
      %v839 = vsel %vm826, %v298, %v467
      %v840 = vsel %vm826, %v299, %v469
      %v841 = vsel %vm826, %v301, %v471
      %v842 = vsel %vm826, %v302, %v473
      %vm843 = vcmask 64512
      %v844 = vsel %vm843, %v827, %v491
      %v845 = vsel %vm843, %v828, %v493
      %v846 = vsel %vm843, %v829, %v495
      %v847 = vsel %vm843, %v830, %v497
      %v848 = vsel %vm843, %v831, %v499
      %v849 = vsel %vm843, %v832, %v501
      %v850 = vsel %vm843, %v833, %v503
      %v851 = vsel %vm843, %v834, %v505
      %v852 = vsel %vm843, %v835, %v507
      %v853 = vsel %vm843, %v836, %v509
      %v854 = vsel %vm843, %v837, %v511
      %v855 = vsel %vm843, %v838, %v513
      %v856 = vsel %vm843, %v839, %v515
      %v857 = vsel %vm843, %v840, %v517
      %v858 = vsel %vm843, %v841, %v519
      %v859 = vsel %vm843, %v842, %v521
      %vm860 = vcmask 97280
      %v861 = vsel %vm860, %v844, %v539
      %v862 = vsel %vm860, %v845, %v541
      %v863 = vsel %vm860, %v846, %v543
      %v864 = vsel %vm860, %v847, %v545
      %v865 = vsel %vm860, %v848, %v547
      %v866 = vsel %vm860, %v849, %v549
      %v867 = vsel %vm860, %v850, %v551
      %v868 = vsel %vm860, %v851, %v553
      %v869 = vsel %vm860, %v852, %v555
      %v870 = vsel %vm860, %v853, %v557
      %v871 = vsel %vm860, %v854, %v559
      %v872 = vsel %vm860, %v855, %v561
      %v873 = vsel %vm860, %v856, %v563
      %v874 = vsel %vm860, %v857, %v565
      %v875 = vsel %vm860, %v858, %v567
      %v876 = vsel %vm860, %v859, %v569
      %vm877 = vcmask 130048
      %v878 = vsel %vm877, %v861, %v587
      %v879 = vsel %vm877, %v862, %v589
      %v880 = vsel %vm877, %v863, %v591
      %v881 = vsel %vm877, %v864, %v593
      %v882 = vsel %vm877, %v865, %v595
      %v883 = vsel %vm877, %v866, %v597
      %v884 = vsel %vm877, %v867, %v599
      %v885 = vsel %vm877, %v868, %v601
      %v886 = vsel %vm877, %v869, %v603
      %v887 = vsel %vm877, %v870, %v605
      %v888 = vsel %vm877, %v871, %v607
      %v889 = vsel %vm877, %v872, %v609
      %v890 = vsel %vm877, %v873, %v611
      %v891 = vsel %vm877, %v874, %v613
      %v892 = vsel %vm877, %v875, %v615
      %v893 = vsel %vm877, %v876, %v617
      %vm894 = vcmask 162816
      %v895 = vsel %vm894, %v878, %v635
      %v896 = vsel %vm894, %v879, %v637
      %v897 = vsel %vm894, %v880, %v639
      %v898 = vsel %vm894, %v881, %v641
      %v899 = vsel %vm894, %v882, %v643
      %v900 = vsel %vm894, %v883, %v645
      %v901 = vsel %vm894, %v884, %v647
      %v902 = vsel %vm894, %v885, %v649
      %v903 = vsel %vm894, %v886, %v651
      %v904 = vsel %vm894, %v887, %v653
      %v905 = vsel %vm894, %v888, %v655
      %v906 = vsel %vm894, %v889, %v657
      %v907 = vsel %vm894, %v890, %v659
      %v908 = vsel %vm894, %v891, %v661
      %v909 = vsel %vm894, %v892, %v663
      %v910 = vsel %vm894, %v893, %v665
      %vm911 = vcmask 195584
      %v912 = vsel %vm911, %v895, %v683
      %v913 = vsel %vm911, %v896, %v685
      %v914 = vsel %vm911, %v897, %v687
      %v915 = vsel %vm911, %v898, %v689
      %v916 = vsel %vm911, %v899, %v691
      %v917 = vsel %vm911, %v900, %v693
      %v918 = vsel %vm911, %v901, %v695
      %v919 = vsel %vm911, %v902, %v697
      %v920 = vsel %vm911, %v903, %v699
      %v921 = vsel %vm911, %v904, %v701
      %v922 = vsel %vm911, %v905, %v703
      %v923 = vsel %vm911, %v906, %v705
      %v924 = vsel %vm911, %v907, %v707
      %v925 = vsel %vm911, %v908, %v709
      %v926 = vsel %vm911, %v909, %v711
      %v927 = vsel %vm911, %v910, %v713
      %vm928 = vcmask 228352
      %v929 = vsel %vm928, %v912, %v731
      %v930 = vsel %vm928, %v913, %v733
      %v931 = vsel %vm928, %v914, %v735
      %v932 = vsel %vm928, %v915, %v737
      %v933 = vsel %vm928, %v916, %v739
      %v934 = vsel %vm928, %v917, %v741
      %v935 = vsel %vm928, %v918, %v743
      %v936 = vsel %vm928, %v919, %v745
      %v937 = vsel %vm928, %v920, %v747
      %v938 = vsel %vm928, %v921, %v749
      %v939 = vsel %vm928, %v922, %v751
      %v940 = vsel %vm928, %v923, %v753
      %v941 = vsel %vm928, %v924, %v755
      %v942 = vsel %vm928, %v925, %v757
      %v943 = vsel %vm928, %v926, %v759
      %v944 = vsel %vm928, %v927, %v761
      %vm945 = vcmask 261120
      %v946 = vsel %vm945, %v929, %v779
      %v947 = vsel %vm945, %v930, %v781
      %v948 = vsel %vm945, %v931, %v783
      %v949 = vsel %vm945, %v932, %v785
      %v950 = vsel %vm945, %v933, %v787
      %v951 = vsel %vm945, %v934, %v789
      %v952 = vsel %vm945, %v935, %v791
      %v953 = vsel %vm945, %v936, %v793
      %v954 = vsel %vm945, %v937, %v795
      %v955 = vsel %vm945, %v938, %v797
      %v956 = vsel %vm945, %v939, %v799
      %v957 = vsel %vm945, %v940, %v801
      %v958 = vsel %vm945, %v941, %v803
      %v959 = vsel %vm945, %v942, %v805
      %v960 = vsel %vm945, %v943, %v807
      %v961 = vsel %vm945, %v944, %v809
      %v962 = vld [vmem:[%s2] sm:$0xff]
      %v963 = vld [vmem:[%s2 + $0x8] sm:$0xff]
      %v964 = vld [vmem:[%s2 + $0x10] sm:$0xff]
      %v965 = vld [vmem:[%s2 + $0x18] sm:$0xff]
      %v966 = vld [vmem:[%s2 + $0x20] sm:$0xf]
      %vm967 = vcmask 293888
      %v969 = vsel %vm967, %v946, 0
      %v972 = vsel %vm967, %v947, 0
      %v975 = vsel %vm967, %v948, 0
      %v978 = vsel %vm967, %v949, 0
      %v981 = vsel %vm967, %v950, 0
      %v984 = vsel %vm967, %v951, 0
      %v987 = vsel %vm967, %v952, 0
      %v990 = vsel %vm967, %v953, 0
      %v993 = vsel %vm967, %v954, 0
      %v996 = vsel %vm967, %v955, 0
      %v999 = vsel %vm967, %v956, 0
      %v1002 = vsel %vm967, %v957, 0
      %v1005 = vsel %vm967, %v958, 0
      %v1008 = vsel %vm967, %v959, 0
      %v1011 = vsel %vm967, %v960, 0
      %v1014 = vsel %vm967, %v961, 0
      %vm1016 = vcmask 1043456
      %v1018 = vsel %vm1016, %v966, 0
      %1020 = vmatprep.subr.mxu0 0.0
      %1021 = vmatpush1.msra.mxu0 0.0
      %1022 = vmatprep.subr.mxu0 0.0
      %1023 = vmatpush1.msra.mxu0 0.0
      %1024 = vmatprep.subr.mxu0 0.0
      %1025 = vmatpush1.msra.mxu0 0.0
      %1026 = vmatprep.subr.mxu0 0.0
      %1027 = vmatpush1.msra.mxu0 0.0
      %1028 = vmatprep.subr.mxu0 0.0
      %1029 = vmatpush1.msra.mxu0 0.0
      %1030 = vmatprep.subr.mxu0 0.0
      %1031 = vmatpush1.msra.mxu0 0.0
      %1032 = vmatprep.subr.mxu0 0.0
      %1033 = vmatpush1.msra.mxu0 0.0
      %1034 = vmatprep.subr.mxu0 0.0
      %1035 = vmatpush1.msra.mxu0 0.0
      %1036 = vmatprep.subr.mxu0 0.0
      %1037 = vmatpush1.msra.mxu0 0.0
      %1038 = vmatprep.subr.mxu0 0.0
      %1039 = vmatpush1.msra.mxu0 0.0
      %1040 = vmatprep.subr.mxu0 0.0
      %1041 = vmatpush1.msra.mxu0 0.0
      %1042 = vmatprep.subr.mxu0 0.0
      %1043 = vmatpush1.msra.mxu0 %v1018
      %1044 = vmatprep.subr.mxu0 0.0
      %1045 = vmatpush1.msra.mxu0 %v965
      %1046 = vmatprep.subr.mxu0 0.0
      %1047 = vmatpush1.msra.mxu0 %v964
      %1048 = vmatprep.subr.mxu0 0.0
      %1049 = vmatpush1.msra.mxu0 %v963
      %1050 = vmatprep.subr.mxu0 0.0
      %1051 = vmatpush1.msra.mxu0 %v962
      %1052 = vmatprep.subr.mxu0 0.0
      %1053 = vmatpush2.msra.mxu0 0.0
      %1054 = vmatprep.subr.mxu0 0.0
      %1055 = vmatpush2.msra.mxu0 0.0
      %1056 = vmatprep.subr.mxu0 0.0
      %1057 = vmatpush2.msra.mxu0 0.0
      %1058 = vmatprep.subr.mxu0 0.0
      %1059 = vmatpush2.msra.mxu0 0.0
      %1060 = vmatprep.subr.mxu0 0.0
      %1061 = vmatpush2.msra.mxu0 0.0
      %1062 = vmatprep.subr.mxu0 0.0
      %1063 = vmatpush2.msra.mxu0 0.0
      %1064 = vmatprep.subr.mxu0 0.0
      %1065 = vmatpush2.msra.mxu0 0.0
      %1066 = vmatprep.subr.mxu0 0.0
      %1067 = vmatpush2.msra.mxu0 0.0
      %1068 = vmatprep.subr.mxu0 0.0
      %1069 = vmatpush2.msra.mxu0 0.0
      %1070 = vmatprep.subr.mxu0 0.0
      %1071 = vmatpush2.msra.mxu0 0.0
      %1072 = vmatprep.subr.mxu0 0.0
      %1073 = vmatpush2.msra.mxu0 0.0
      %1074 = vmatprep.subr.mxu0 0.0
      %1075 = vmatpush2.msra.mxu0 0.0
      %1076 = vmatprep.subr.mxu0 0.0
      %1077 = vmatpush2.msra.mxu0 0.0
      %1078 = vmatprep.subr.mxu0 0.0
      %1079 = vmatpush2.msra.mxu0 0.0
      %1080 = vmatprep.subr.mxu0 0.0
      %1081 = vmatpush2.msra.mxu0 0.0
      %1082 = vmatprep.subr.mxu0 0.0
      %1083 = vmatpush2.msra.mxu0 0.0
      %1084 = vmatprep.mubr.f32.mxu0 0.0
      %1085 = vmatmul.mubr.f32.gmra.mxu0 %v969
      %v1086 = vpop.f32.mrf.mxu0
      %v1087 = vadd.f32 0.0, %v1086
      %v1088 = vpop.f32.mrf.mxu0
      %1089 = vmatprep.mubr.f32.mxu0 0.0
      %1090 = vmatmul.mubr.f32.gmra.mxu0 %v972
      %v1091 = vpop.f32.mrf.mxu0
      %v1092 = vadd.f32 0.0, %v1091
      %v1093 = vpop.f32.mrf.mxu0
      %1094 = vmatprep.mubr.f32.mxu0 0.0
      %1095 = vmatmul.mubr.f32.gmra.mxu0 %v975
      %v1096 = vpop.f32.mrf.mxu0
      %v1097 = vadd.f32 0.0, %v1096
      %v1098 = vpop.f32.mrf.mxu0
      %1099 = vmatprep.mubr.f32.mxu0 0.0
      %1100 = vmatmul.mubr.f32.gmra.mxu0 %v978
      %v1101 = vpop.f32.mrf.mxu0
      %v1102 = vadd.f32 0.0, %v1101
      %v1103 = vpop.f32.mrf.mxu0
      %1104 = vmatprep.mubr.f32.mxu0 0.0
      %1105 = vmatmul.mubr.f32.gmra.mxu0 %v981
      %v1106 = vpop.f32.mrf.mxu0
      %v1107 = vadd.f32 0.0, %v1106
      %v1108 = vpop.f32.mrf.mxu0
      %1109 = vmatprep.mubr.f32.mxu0 0.0
      %1110 = vmatmul.mubr.f32.gmra.mxu0 %v984
      %v1111 = vpop.f32.mrf.mxu0
      %v1112 = vadd.f32 0.0, %v1111
      %v1113 = vpop.f32.mrf.mxu0
      %1114 = vmatprep.mubr.f32.mxu0 0.0
      %1115 = vmatmul.mubr.f32.gmra.mxu0 %v987
      %v1116 = vpop.f32.mrf.mxu0
      %v1117 = vadd.f32 0.0, %v1116
      %v1118 = vpop.f32.mrf.mxu0
      %1119 = vmatprep.mubr.f32.mxu0 0.0
      %1120 = vmatmul.mubr.f32.gmra.mxu0 %v990
      %v1121 = vpop.f32.mrf.mxu0
      %v1122 = vadd.f32 0.0, %v1121
      %v1123 = vpop.f32.mrf.mxu0
      %1124 = vmatprep.mubr.f32.mxu0 0.0
      %1125 = vmatmul.mubr.f32.gmra.mxu0 %v993
      %v1126 = vpop.f32.mrf.mxu0
      %v1127 = vadd.f32 0.0, %v1126
      %v1128 = vpop.f32.mrf.mxu0
      %1129 = vmatprep.mubr.f32.mxu0 0.0
      %1130 = vmatmul.mubr.f32.gmra.mxu0 %v996
      %v1131 = vpop.f32.mrf.mxu0
      %v1132 = vadd.f32 0.0, %v1131
      %v1133 = vpop.f32.mrf.mxu0
      %1134 = vmatprep.mubr.f32.mxu0 0.0
      %1135 = vmatmul.mubr.f32.gmra.mxu0 %v999
      %v1136 = vpop.f32.mrf.mxu0
      %v1137 = vadd.f32 0.0, %v1136
      %v1138 = vpop.f32.mrf.mxu0
      %1139 = vmatprep.mubr.f32.mxu0 0.0
      %1140 = vmatmul.mubr.f32.gmra.mxu0 %v1002
      %v1141 = vpop.f32.mrf.mxu0
      %v1142 = vadd.f32 0.0, %v1141
      %v1143 = vpop.f32.mrf.mxu0
      %1144 = vmatprep.mubr.f32.mxu0 0.0
      %1145 = vmatmul.mubr.f32.gmra.mxu0 %v1005
      %v1146 = vpop.f32.mrf.mxu0
      %v1147 = vadd.f32 0.0, %v1146
      %v1148 = vpop.f32.mrf.mxu0
      %1149 = vmatprep.mubr.f32.mxu0 0.0
      %1150 = vmatmul.mubr.f32.gmra.mxu0 %v1008
      %v1151 = vpop.f32.mrf.mxu0
      %v1152 = vadd.f32 0.0, %v1151
      %v1153 = vpop.f32.mrf.mxu0
      %1154 = vmatprep.mubr.f32.mxu0 0.0
      %1155 = vmatmul.mubr.f32.gmra.mxu0 %v1011
      %v1156 = vpop.f32.mrf.mxu0
      %v1157 = vadd.f32 0.0, %v1156
      %v1158 = vpop.f32.mrf.mxu0
      %1159 = vmatprep.mubr.f32.mxu0 0.0
      %1160 = vmatmul.mubr.f32.gmra.mxu0 %v1014
      %v1161 = vpop.f32.mrf.mxu0
      %v1162 = vadd.f32 0.0, %v1161
      %v1163 = vpop.f32.mrf.mxu0
      %1164 = vdwg.mxu0
      %s1165 = smul.u32 %s19, 8
      %s1166 = smul.u32 %s1165, 16
      %s1167 = scalar_lea.vmem %s279, %s1166
      %1168 = vst.msk [vmem:[%s1167] sm:$0xff] %vm826, %v1087
      %1169 = vst.msk [vmem:[%s1167 + $0x8] sm:$0xff] %vm826, %v1092
      %1170 = vst.msk [vmem:[%s1167 + $0x10] sm:$0xff] %vm826, %v1097
      %1171 = vst.msk [vmem:[%s1167 + $0x18] sm:$0xff] %vm826, %v1102
      %1172 = vst.msk [vmem:[%s1167 + $0x20] sm:$0xff] %vm826, %v1107
      %1173 = vst.msk [vmem:[%s1167 + $0x28] sm:$0xff] %vm826, %v1112
      %1174 = vst.msk [vmem:[%s1167 + $0x30] sm:$0xff] %vm826, %v1117
      %1175 = vst.msk [vmem:[%s1167 + $0x38] sm:$0xff] %vm826, %v1122
      %1176 = vst.msk [vmem:[%s1167 + $0x40] sm:$0xff] %vm826, %v1127
      %1177 = vst.msk [vmem:[%s1167 + $0x48] sm:$0xff] %vm826, %v1132
      %1178 = vst.msk [vmem:[%s1167 + $0x50] sm:$0xff] %vm826, %v1137
      %1179 = vst.msk [vmem:[%s1167 + $0x58] sm:$0xff] %vm826, %v1142
      %1180 = vst.msk [vmem:[%s1167 + $0x60] sm:$0xff] %vm826, %v1147
      %1181 = vst.msk [vmem:[%s1167 + $0x68] sm:$0xff] %vm826, %v1152
      %1182 = vst.msk [vmem:[%s1167 + $0x70] sm:$0xff] %vm826, %v1157
      %1183 = vst.msk [vmem:[%s1167 + $0x78] sm:$0xff] %vm826, %v1162
      %p1184 = scmp.eq.s32.totalorder %s19, 0
      // Predicated region
      $region33: #{tpu_custom_call.1} parent=31 // pred_check
        %p1185 = pneg %p1184
      $region34: #{tpu_custom_call.1} parent=31 // pred_check_branch
        %1187 = sbr.rel (%p1185) target = $region36
      $region35: #{tpu_custom_call.1} parent=31 // pred_region
        %vm1188 = vcmask 24576
        %1189 = vst.msk [vmem:[#allocation2] sm:$0x1] %vm1188, 0.0
        %1190 = vst.msk [vmem:[#allocation3] sm:$0x1] %vm1188, 0.0
      $region36: #{tpu_custom_call.1} parent=31 // pred_fallthru
        _
      %v1191 = vld [vmem:[#allocation2] sm:$0x1]
      %v1192 = vsel %vm826, %v1087, 0.0
      %v1193 = vsel %vm826, %v1092, 0.0
      %v1194 = vadd.f32 %v1192, %v1193
      %v1195 = vsel %vm826, %v1097, 0.0
      %v1196 = vadd.f32 %v1194, %v1195
      %v1197 = vsel %vm826, %v1102, 0.0
      %v1198 = vadd.f32 %v1196, %v1197
      %v1199 = vsel %vm826, %v1107, 0.0
      %v1200 = vadd.f32 %v1198, %v1199
      %v1201 = vsel %vm826, %v1112, 0.0
      %v1202 = vadd.f32 %v1200, %v1201
      %v1203 = vsel %vm826, %v1117, 0.0
      %v1204 = vadd.f32 %v1202, %v1203
      %v1205 = vsel %vm826, %v1122, 0.0
      %v1206 = vadd.f32 %v1204, %v1205
      %v1207 = vsel %vm826, %v1127, 0.0
      %v1208 = vadd.f32 %v1206, %v1207
      %v1209 = vsel %vm826, %v1132, 0.0
      %v1210 = vadd.f32 %v1208, %v1209
      %v1211 = vsel %vm826, %v1137, 0.0
      %v1212 = vadd.f32 %v1210, %v1211
      %v1213 = vsel %vm826, %v1142, 0.0
      %v1214 = vadd.f32 %v1212, %v1213
      %v1215 = vsel %vm826, %v1147, 0.0
      %v1216 = vadd.f32 %v1214, %v1215
      %v1217 = vsel %vm826, %v1152, 0.0
      %v1218 = vadd.f32 %v1216, %v1217
      %v1219 = vsel %vm826, %v1157, 0.0
      %v1220 = vadd.f32 %v1218, %v1219
      %v1221 = vsel %vm826, %v1162, 0.0
      %v1222 = vadd.f32 %v1220, %v1221
      %v1223 = vrot.slane %v1222, 4
      %v1224 = vadd.f32 %v1222, %v1223
      %v1225 = vrot.slane %v1224, 2
      %v1226 = vadd.f32 %v1224, %v1225
      %v1227 = vrot.slane %v1226, 1
      %v1228 = vadd.f32 %v1226, %v1227
      %v1229 = vadd.f32 %v1191, %v1228
      %vm1230 = vcmask 24576
      %1231 = vst.msk [vmem:[#allocation2] sm:$0x1] %vm1230, %v1229
      %v1232 = vld [vmem:[#allocation3] sm:$0x1]
      %v1233 = vmul.f32 %v1087, %v1087
      %v1234 = vmul.f32 %v1092, %v1092
      %v1235 = vmul.f32 %v1097, %v1097
      %v1236 = vmul.f32 %v1102, %v1102
      %v1237 = vmul.f32 %v1107, %v1107
      %v1238 = vmul.f32 %v1112, %v1112
      %v1239 = vmul.f32 %v1117, %v1117
      %v1240 = vmul.f32 %v1122, %v1122
      %v1241 = vmul.f32 %v1127, %v1127
      %v1242 = vmul.f32 %v1132, %v1132
      %v1243 = vmul.f32 %v1137, %v1137
      %v1244 = vmul.f32 %v1142, %v1142
      %v1245 = vmul.f32 %v1147, %v1147
      %v1246 = vmul.f32 %v1152, %v1152
      %v1247 = vmul.f32 %v1157, %v1157
      %v1248 = vmul.f32 %v1162, %v1162
      %v1249 = vsel %vm826, %v1233, 0.0
      %v1250 = vsel %vm826, %v1234, 0.0
      %v1251 = vadd.f32 %v1249, %v1250
      %v1252 = vsel %vm826, %v1235, 0.0
      %v1253 = vadd.f32 %v1251, %v1252
      %v1254 = vsel %vm826, %v1236, 0.0
      %v1255 = vadd.f32 %v1253, %v1254
      %v1256 = vsel %vm826, %v1237, 0.0
      %v1257 = vadd.f32 %v1255, %v1256
      %v1258 = vsel %vm826, %v1238, 0.0
      %v1259 = vadd.f32 %v1257, %v1258
      %v1260 = vsel %vm826, %v1239, 0.0
      %v1261 = vadd.f32 %v1259, %v1260
      %v1262 = vsel %vm826, %v1240, 0.0
      %v1263 = vadd.f32 %v1261, %v1262
      %v1264 = vsel %vm826, %v1241, 0.0
      %v1265 = vadd.f32 %v1263, %v1264
      %v1266 = vsel %vm826, %v1242, 0.0
      %v1267 = vadd.f32 %v1265, %v1266
      %v1268 = vsel %vm826, %v1243, 0.0
      %v1269 = vadd.f32 %v1267, %v1268
      %v1270 = vsel %vm826, %v1244, 0.0
      %v1271 = vadd.f32 %v1269, %v1270
      %v1272 = vsel %vm826, %v1245, 0.0
      %v1273 = vadd.f32 %v1271, %v1272
      %v1274 = vsel %vm826, %v1246, 0.0
      %v1275 = vadd.f32 %v1273, %v1274
      %v1276 = vsel %vm826, %v1247, 0.0
      %v1277 = vadd.f32 %v1275, %v1276
      %v1278 = vsel %vm826, %v1248, 0.0
      %v1279 = vadd.f32 %v1277, %v1278
      %v1280 = vrot.slane %v1279, 4
      %v1281 = vadd.f32 %v1279, %v1280
      %v1282 = vrot.slane %v1281, 2
      %v1283 = vadd.f32 %v1281, %v1282
      %v1284 = vrot.slane %v1283, 1
      %v1285 = vadd.f32 %v1283, %v1284
      %v1286 = vadd.f32 %v1232, %v1285
      %1287 = vst.msk [vmem:[#allocation3] sm:$0x1] %vm1230, %v1286
      %p1288 = scmp.eq.s32.totalorder %s19, 1
      // Predicated region
      $region37: #{tpu_custom_call.1} parent=31 // pred_check
        %p1289 = pneg %p1288
      $region38: #{tpu_custom_call.1} parent=31 // pred_check_branch
        %1291 = sbr.rel (%p1289) target = $region40
      $region39: #{tpu_custom_call.1} parent=31 // pred_region
        %v1292 = vld [vmem:[#allocation2] sm:$0x1]
        %v1293 = vmul.f32 %v1292, 0.00390625
        %v1294 = vld [vmem:[#allocation3] sm:$0x1]
        %v1295 = vmul.f32 %v1294, 0.00390625
        %v1296 = vmul.f32 %v1293, %v1293
        %v1297 = vsub.f32 %v1295, %v1296
        %v1298 = vadd.f32 %v1297, 1e-05
        %v1299 = vrsqrt.pop %v1298
        %v1300 = vld [vmem:[%s279] sm:$0xff]
        %v1301 = vld [vmem:[%s279 + $0x8] sm:$0xff]
        %v1302 = vld [vmem:[%s279 + $0x10] sm:$0xff]
        %v1303 = vld [vmem:[%s279 + $0x18] sm:$0xff]
        %v1304 = vld [vmem:[%s279 + $0x20] sm:$0xff]
        %v1305 = vld [vmem:[%s279 + $0x28] sm:$0xff]
        %v1306 = vld [vmem:[%s279 + $0x30] sm:$0xff]
        %v1307 = vld [vmem:[%s279 + $0x38] sm:$0xff]
        %v1308 = vld [vmem:[%s279 + $0x40] sm:$0xff]
        %v1309 = vld [vmem:[%s279 + $0x48] sm:$0xff]
        %v1310 = vld [vmem:[%s279 + $0x50] sm:$0xff]
        %v1311 = vld [vmem:[%s279 + $0x58] sm:$0xff]
        %v1312 = vld [vmem:[%s279 + $0x60] sm:$0xff]
        %v1313 = vld [vmem:[%s279 + $0x68] sm:$0xff]
        %v1314 = vld [vmem:[%s279 + $0x70] sm:$0xff]
        %v1315 = vld [vmem:[%s279 + $0x78] sm:$0xff]
        %v1316 = vld [vmem:[%s279 + $0x80] sm:$0xff]
        %v1317 = vld [vmem:[%s279 + $0x88] sm:$0xff]
        %v1318 = vld [vmem:[%s279 + $0x90] sm:$0xff]
        %v1319 = vld [vmem:[%s279 + $0x98] sm:$0xff]
        %v1320 = vld [vmem:[%s279 + $0xa0] sm:$0xff]
        %v1321 = vld [vmem:[%s279 + $0xa8] sm:$0xff]
        %v1322 = vld [vmem:[%s279 + $0xb0] sm:$0xff]
        %v1323 = vld [vmem:[%s279 + $0xb8] sm:$0xff]
        %v1324 = vld [vmem:[%s279 + $0xc0] sm:$0xff]
        %v1325 = vld [vmem:[%s279 + $0xc8] sm:$0xff]
        %v1326 = vld [vmem:[%s279 + $0xd0] sm:$0xff]
        %v1327 = vld [vmem:[%s279 + $0xd8] sm:$0xff]
        %v1328 = vld [vmem:[%s279 + $0xe0] sm:$0xff]
        %v1329 = vld [vmem:[%s279 + $0xe8] sm:$0xff]
        %v1330 = vld [vmem:[%s279 + $0xf0] sm:$0xff]
        %v1331 = vld [vmem:[%s279 + $0xf8] sm:$0xff]
        %v1333 = vlaneseq
        %v1334 = vshrl.u32 %v1333, 7
        %v1335 = vsub.s32 0, %v1334
        %v1336 = vrot.slane %v1293, %v1335
        %v1338 = vsub.f32 %v1300, %v1336
        %v1339 = vsub.f32 %v1301, %v1336
        %v1340 = vsub.f32 %v1302, %v1336
        %v1341 = vsub.f32 %v1303, %v1336
        %v1342 = vsub.f32 %v1304, %v1336
        %v1343 = vsub.f32 %v1305, %v1336
        %v1344 = vsub.f32 %v1306, %v1336
        %v1345 = vsub.f32 %v1307, %v1336
        %v1346 = vsub.f32 %v1308, %v1336
        %v1347 = vsub.f32 %v1309, %v1336
        %v1348 = vsub.f32 %v1310, %v1336
        %v1349 = vsub.f32 %v1311, %v1336
        %v1350 = vsub.f32 %v1312, %v1336
        %v1351 = vsub.f32 %v1313, %v1336
        %v1352 = vsub.f32 %v1314, %v1336
        %v1353 = vsub.f32 %v1315, %v1336
        %v1354 = vsub.f32 %v1316, %v1336
        %v1355 = vsub.f32 %v1317, %v1336
        %v1356 = vsub.f32 %v1318, %v1336
        %v1357 = vsub.f32 %v1319, %v1336
        %v1358 = vsub.f32 %v1320, %v1336
        %v1359 = vsub.f32 %v1321, %v1336
        %v1360 = vsub.f32 %v1322, %v1336
        %v1361 = vsub.f32 %v1323, %v1336
        %v1362 = vsub.f32 %v1324, %v1336
        %v1363 = vsub.f32 %v1325, %v1336
        %v1364 = vsub.f32 %v1326, %v1336
        %v1365 = vsub.f32 %v1327, %v1336
        %v1366 = vsub.f32 %v1328, %v1336
        %v1367 = vsub.f32 %v1329, %v1336
        %v1368 = vsub.f32 %v1330, %v1336
        %v1369 = vsub.f32 %v1331, %v1336
        %v1371 = vlaneseq
        %v1372 = vshrl.u32 %v1371, 7
        %v1373 = vsub.s32 0, %v1372
        %v1374 = vrot.slane %v1299, %v1373
        %v1376 = vmul.f32 %v1338, %v1374
        %v1377 = vmul.f32 %v1339, %v1374
        %v1378 = vmul.f32 %v1340, %v1374
        %v1379 = vmul.f32 %v1341, %v1374
        %v1380 = vmul.f32 %v1342, %v1374
        %v1381 = vmul.f32 %v1343, %v1374
        %v1382 = vmul.f32 %v1344, %v1374
        %v1383 = vmul.f32 %v1345, %v1374
        %v1384 = vmul.f32 %v1346, %v1374
        %v1385 = vmul.f32 %v1347, %v1374
        %v1386 = vmul.f32 %v1348, %v1374
        %v1387 = vmul.f32 %v1349, %v1374
        %v1388 = vmul.f32 %v1350, %v1374
        %v1389 = vmul.f32 %v1351, %v1374
        %v1390 = vmul.f32 %v1352, %v1374
        %v1391 = vmul.f32 %v1353, %v1374
        %v1392 = vmul.f32 %v1354, %v1374
        %v1393 = vmul.f32 %v1355, %v1374
        %v1394 = vmul.f32 %v1356, %v1374
        %v1395 = vmul.f32 %v1357, %v1374
        %v1396 = vmul.f32 %v1358, %v1374
        %v1397 = vmul.f32 %v1359, %v1374
        %v1398 = vmul.f32 %v1360, %v1374
        %v1399 = vmul.f32 %v1361, %v1374
        %v1400 = vmul.f32 %v1362, %v1374
        %v1401 = vmul.f32 %v1363, %v1374
        %v1402 = vmul.f32 %v1364, %v1374
        %v1403 = vmul.f32 %v1365, %v1374
        %v1404 = vmul.f32 %v1366, %v1374
        %v1405 = vmul.f32 %v1367, %v1374
        %v1406 = vmul.f32 %v1368, %v1374
        %v1407 = vmul.f32 %v1369, %v1374
        %v1408 = vmax.f32 %v1376, 0.0
        %v1409 = vmax.f32 %v1377, 0.0
        %v1410 = vmax.f32 %v1378, 0.0
        %v1411 = vmax.f32 %v1379, 0.0
        %v1412 = vmax.f32 %v1380, 0.0
        %v1413 = vmax.f32 %v1381, 0.0
        %v1414 = vmax.f32 %v1382, 0.0
        %v1415 = vmax.f32 %v1383, 0.0
        %v1416 = vmax.f32 %v1384, 0.0
        %v1417 = vmax.f32 %v1385, 0.0
        %v1418 = vmax.f32 %v1386, 0.0
        %v1419 = vmax.f32 %v1387, 0.0
        %v1420 = vmax.f32 %v1388, 0.0
        %v1421 = vmax.f32 %v1389, 0.0
        %v1422 = vmax.f32 %v1390, 0.0
        %v1423 = vmax.f32 %v1391, 0.0
        %v1424 = vmax.f32 %v1392, 0.0
        %v1425 = vmax.f32 %v1393, 0.0
        %v1426 = vmax.f32 %v1394, 0.0
        %v1427 = vmax.f32 %v1395, 0.0
        %v1428 = vmax.f32 %v1396, 0.0
        %v1429 = vmax.f32 %v1397, 0.0
        %v1430 = vmax.f32 %v1398, 0.0
        %v1431 = vmax.f32 %v1399, 0.0
        %v1432 = vmax.f32 %v1400, 0.0
        %v1433 = vmax.f32 %v1401, 0.0
        %v1434 = vmax.f32 %v1402, 0.0
        %v1435 = vmax.f32 %v1403, 0.0
        %v1436 = vmax.f32 %v1404, 0.0
        %v1437 = vmax.f32 %v1405, 0.0
        %v1438 = vmax.f32 %v1406, 0.0
        %v1439 = vmax.f32 %v1407, 0.0
        %1440 = vst.msk [vmem:[%s279] sm:$0xff] %vm826, %v1408
        %1441 = vst.msk [vmem:[%s279 + $0x8] sm:$0xff] %vm826, %v1409
        %1442 = vst.msk [vmem:[%s279 + $0x10] sm:$0xff] %vm826, %v1410
        %1443 = vst.msk [vmem:[%s279 + $0x18] sm:$0xff] %vm826, %v1411
        %1444 = vst.msk [vmem:[%s279 + $0x20] sm:$0xff] %vm826, %v1412
        %1445 = vst.msk [vmem:[%s279 + $0x28] sm:$0xff] %vm826, %v1413
        %1446 = vst.msk [vmem:[%s279 + $0x30] sm:$0xff] %vm826, %v1414
        %1447 = vst.msk [vmem:[%s279 + $0x38] sm:$0xff] %vm826, %v1415
        %1448 = vst.msk [vmem:[%s279 + $0x40] sm:$0xff] %vm826, %v1416
        %1449 = vst.msk [vmem:[%s279 + $0x48] sm:$0xff] %vm826, %v1417
        %1450 = vst.msk [vmem:[%s279 + $0x50] sm:$0xff] %vm826, %v1418
        %1451 = vst.msk [vmem:[%s279 + $0x58] sm:$0xff] %vm826, %v1419
        %1452 = vst.msk [vmem:[%s279 + $0x60] sm:$0xff] %vm826, %v1420
        %1453 = vst.msk [vmem:[%s279 + $0x68] sm:$0xff] %vm826, %v1421
        %1454 = vst.msk [vmem:[%s279 + $0x70] sm:$0xff] %vm826, %v1422
        %1455 = vst.msk [vmem:[%s279 + $0x78] sm:$0xff] %vm826, %v1423
        %1456 = vst.msk [vmem:[%s279 + $0x80] sm:$0xff] %vm826, %v1424
        %1457 = vst.msk [vmem:[%s279 + $0x88] sm:$0xff] %vm826, %v1425
        %1458 = vst.msk [vmem:[%s279 + $0x90] sm:$0xff] %vm826, %v1426
        %1459 = vst.msk [vmem:[%s279 + $0x98] sm:$0xff] %vm826, %v1427
        %1460 = vst.msk [vmem:[%s279 + $0xa0] sm:$0xff] %vm826, %v1428
        %1461 = vst.msk [vmem:[%s279 + $0xa8] sm:$0xff] %vm826, %v1429
        %1462 = vst.msk [vmem:[%s279 + $0xb0] sm:$0xff] %vm826, %v1430
        %1463 = vst.msk [vmem:[%s279 + $0xb8] sm:$0xff] %vm826, %v1431
        %1464 = vst.msk [vmem:[%s279 + $0xc0] sm:$0xff] %vm826, %v1432
        %1465 = vst.msk [vmem:[%s279 + $0xc8] sm:$0xff] %vm826, %v1433
        %1466 = vst.msk [vmem:[%s279 + $0xd0] sm:$0xff] %vm826, %v1434
        %1467 = vst.msk [vmem:[%s279 + $0xd8] sm:$0xff] %vm826, %v1435
        %1468 = vst.msk [vmem:[%s279 + $0xe0] sm:$0xff] %vm826, %v1436
        %1469 = vst.msk [vmem:[%s279 + $0xe8] sm:$0xff] %vm826, %v1437
        %1470 = vst.msk [vmem:[%s279 + $0xf0] sm:$0xff] %vm826, %v1438
        %1471 = vst.msk [vmem:[%s279 + $0xf8] sm:$0xff] %vm826, %v1439
      $region40: #{tpu_custom_call.1} parent=31 // pred_fallthru
        _
      %p1472 = scmp.lt.s32.totalorder %s18, 1
      %s1473 = scalar_select %p1472, %s18, 1
      %s1474 = smul.addr %s1473, 32
      %s1475 = smul.addr %s1474, 8
      %s1476 = scalar_lea.vmem %s3, %s1475
      // Predicated region
      $region41: #{tpu_custom_call.1} parent=31 // pred_check
        %p1477 = pneg %p125
      $region42: #{tpu_custom_call.1} parent=31 // pred_check_branch
        %1479 = sbr.rel (%p1477) target = $region44
      $region43: #{tpu_custom_call.1} parent=31 // pred_region
        _
      $region44: #{tpu_custom_call.1} parent=31 // pred_fallthru
        _
    $region32: #{tpu_custom_call.1} parent=5 // pred_fallthru
      _
    %p1480 = scmp.le.s32.totalorder 2, %s9
    // Predicated region
    $region45: #{tpu_custom_call.1} parent=5 // pred_check
      %p1481 = pneg %p1480
    $region46: #{tpu_custom_call.1} parent=5 // pred_check_branch
      %1483 = sbr.rel (%p1481) target = $region48
    $region47: #{tpu_custom_call.1} parent=5 // pred_region
      %s1484 = ssub.s32 %s9, 2
      // Predicated region
      $region49: #{tpu_custom_call.1} parent=47 // pred_check
        %p1485 = pneg %p131
      $region50: #{tpu_custom_call.1} parent=47 // pred_check_branch
        %1487 = sbr.rel (%p1485) target = $region52
      $region51: #{tpu_custom_call.1} parent=47 // pred_region
        %p1488 = scmp.lt.s32.totalorder %s20, 1
        %s1489 = scalar_select %p1488, %s20, 1
        %s1490 = smul.addr %s1489, 32
        %s1491 = smul.addr %s1490, 8
        %s1492 = scalar_lea.vmem %s3, %s1491
      $region52: #{tpu_custom_call.1} parent=47 // pred_fallthru
        _
    $region48: #{tpu_custom_call.1} parent=5 // pred_fallthru
      _
  $region6: #{tpu_custom_call.1} parent=0 // loop_footer
    %s13 = sadd.s32 1, %s9
  $region7: #{tpu_custom_call.1} parent=0 // loop_footer_branch
    %8 = sbr.rel target = $region3
  $region8: #{tpu_custom_call.1} parent=0 // loop_exit
    _

</llo_original>
